<compile_context>
chip_gen: v5e
topology: v5e:2x2
jax: 0.10.0
libtpu: 0.0.40
codegen_flags: <defaults>
</compile_context>

<pallas_src>
import jax
import jax.numpy as jnp
from jax import lax
from jax.experimental import pallas as pl
from jax.experimental.pallas import tpu as pltpu

SEQUENCES_LENGTH = 40
HIDDEN_SIZE = 100
HIDDEN_PAD = 128          # lane-aligned hidden width (zero-padded 100 -> 128)
SUBLANE = 8               # batch padded to a multiple of 8 (sublane granularity)


def rnn_kernel(x_ref, wh_ref, p_ref, y_ref, xw_ref):
    """Shapes (all f32, hidden zero-padded to HP=128 lanes):
       x_ref : (SEQ, Bp, 1)   time-major inputs
       wh_ref: (HP, HP)       i2h recurrent weight, pre-transposed (h @ wh)
       p_ref : (8, HP)        packed small params:
                                row 0 = wx  (i2h column multiplying x_t)
                                row 1 = bi  (i2h bias)
                                row 2 = wo  (h2o weight row)
                                row 3 col 0 = bo (h2o bias)
       y_ref : (Bp, 1)        output
       xw_ref: (SEQ, Bp, HP)  VMEM scratch: per-step input projection + bias
    """
    seq = x_ref.shape[0]

    wx = p_ref[0:1, :]       # (1, HP)
    bi = p_ref[1:2, :]       # (1, HP)
    wo = p_ref[2:3, :]       # (1, HP)
    bo = p_ref[3:4, 0:1]     # (1, 1)

    # Hoist the input projection out of the recurrence: one VPU broadcast, off
    # the serial dependency chain, instead of a degenerate K=1 MXU matmul per
    # step.
    xw_ref[...] = x_ref[...] * wx[None] + bi[None]

    wh = wh_ref[...]                                   # (HP, HP), VMEM resident

    def step(t, h):
        # Per-step critical chain: (Bp,HP)@(HP,HP) MXU -> VPU add -> EUP tanh.
        pre = jnp.dot(h, wh, preferred_element_type=jnp.float32) + xw_ref[t]
        return jnp.tanh(pre)

    h0 = jnp.zeros(xw_ref.shape[1:], dtype=jnp.float32)
    # SEQ is static -> fully unroll for LLO scheduling visibility.
    h = lax.fori_loop(0, seq, step, h0, unroll=True)

    # h2o: Linear(100 -> 1) as a VPU multiply + lane reduction (padded lanes of
    # wo are zero, so they contribute nothing).
    y_ref[...] = jnp.sum(h * wo, axis=-1, keepdims=True) + bo


def vanilla_rnn_forward(x, i2h_w, i2h_b, h2o_w, h2o_b):
    """x: (B, SEQ, 1).  Weights in PyTorch Linear convention: (out, in)."""
    B, S, F = x.shape
    assert S == SEQUENCES_LENGTH
    assert F == 1
    H, HP = HIDDEN_SIZE, HIDDEN_PAD
    Bp = ((B + SUBLANE - 1) // SUBLANE) * SUBLANE

    # Time-major input, batch padded to a multiple of 8.
    x_t = jnp.transpose(x.astype(jnp.float32), (1, 0, 2))            # (SEQ, B, 1)
    x_t = jnp.pad(x_t, ((0, 0), (0, Bp - B), (0, 0)))                # (SEQ, Bp, 1)

    # i2h weight: (H, 1+H).  Column 0 multiplies x_t, columns 1: multiply hidden.
    # Everything is pre-transposed for `activations @ W` and zero-padded to 128.
    i2h_w = i2h_w.astype(jnp.float32)
    wh = jnp.pad(jnp.transpose(i2h_w[:, 1:]), ((0, HP - H), (0, HP - H)))   # (HP, HP)

    # Pack all small vectors into a single (8, HP) tile (one DMA / allocation).
    params = jnp.zeros((SUBLANE, HP), jnp.float32)
    params = params.at[0, :H].set(i2h_w[:, 0])                        # wx
    params = params.at[1, :H].set(i2h_b.astype(jnp.float32))          # bi
    params = params.at[2, :H].set(h2o_w.astype(jnp.float32).reshape(H))   # wo
    params = params.at[3, 0].set(h2o_b.astype(jnp.float32).reshape(())[()])  # bo

    vmem = pl.BlockSpec(memory_space=pltpu.MemorySpace.VMEM)
    y = pl.pallas_call(
        rnn_kernel,
        out_shape=jax.ShapeDtypeStruct((Bp, 1), jnp.float32),
        in_specs=[vmem, vmem, vmem],
        out_specs=vmem,
        scratch_shapes=[pltpu.VMEM((SEQUENCES_LENGTH, Bp, HP), jnp.float32)],
    )(x_t, wh, params)
    return y[:B]


def _init_params(key):
    """Deterministic init matching PyTorch Linear default (uniform ±1/sqrt(fan_in))."""
    k1, k2, k3, k4 = jax.random.split(key, 4)
    fan_i2h = 1 + HIDDEN_SIZE
    bound1 = 1.0 / jnp.sqrt(float(fan_i2h))
    i2h_w = jax.random.uniform(k1, (HIDDEN_SIZE, fan_i2h), jnp.float32,
                               -bound1, bound1)
    i2h_b = jax.random.uniform(k2, (HIDDEN_SIZE,), jnp.float32, -bound1, bound1)
    bound2 = 1.0 / jnp.sqrt(float(HIDDEN_SIZE))
    h2o_w = jax.random.uniform(k3, (1, HIDDEN_SIZE), jnp.float32, -bound2, bound2)
    h2o_b = jax.random.uniform(k4, (1,), jnp.float32, -bound2, bound2)
    return i2h_w, i2h_b, h2o_w, h2o_b


def _reference_forward(x, i2h_w, i2h_b, h2o_w, h2o_b):
    """Pure-JAX reference mirroring the PyTorch loop (for a sanity check)."""
    B = x.shape[0]
    h = jnp.zeros((B, HIDDEN_SIZE), jnp.float32)
    for t in range(SEQUENCES_LENGTH):
        combined = jnp.concatenate([x[:, t, :], h], axis=1)   # (B, 1+H)
        h = jnp.tanh(combined @ i2h_w.T + i2h_b)
    return h @ h2o_w.T + h2o_b


if __name__ == "__main__":
    key = jax.random.PRNGKey(0)
    kx, kp = jax.random.split(key)

    B = 8
    x = jax.random.normal(kx, (B, SEQUENCES_LENGTH, 1), jnp.float32)
    i2h_w, i2h_b, h2o_w, h2o_b = _init_params(kp)

    y = vanilla_rnn_forward(x, i2h_w, i2h_b, h2o_w, h2o_b)
    y = jax.block_until_ready(y)

    y_ref = _reference_forward(x, i2h_w, i2h_b, h2o_w, h2o_b)
    assert y.shape == (B, 1)
    assert jnp.allclose(y, y_ref, atol=2e-5, rtol=2e-5)

    print("KERNEL_OK")
</pallas_src>

<mosaic_0001>
module attributes {stable_mosaic.version = 11 : i64} {
  func.func @rnn_kernel(%arg0: memref<40x8x1xf32, #tpu.memory_space<vmem>>, %arg1: memref<128x128xf32, #tpu.memory_space<vmem>>, %arg2: memref<8x128xf32, #tpu.memory_space<vmem>>, %arg3: memref<8x1xf32, #tpu.memory_space<vmem>>, %arg4: memref<40x8x128xf32, #tpu.memory_space<vmem>>) attributes {dimension_semantics = [], scalar_prefetch = 0 : i64, scratch_operands = 1 : i64, tpu.core_type = #tpu.core_type<tc>} {
    %c0 = arith.constant 0 : index
    %c0_0 = arith.constant 0 : index
    %0 = vector.load %arg2[%c0, %c0_0] : memref<8x128xf32, #tpu.memory_space<vmem>>, vector<1x128xf32>
    %c1 = arith.constant 1 : index
    %c0_1 = arith.constant 0 : index
    %1 = vector.load %arg2[%c1, %c0_1] : memref<8x128xf32, #tpu.memory_space<vmem>>, vector<1x128xf32>
    %c2 = arith.constant 2 : index
    %c0_2 = arith.constant 0 : index
    %2 = vector.load %arg2[%c2, %c0_2] : memref<8x128xf32, #tpu.memory_space<vmem>>, vector<1x128xf32>
    %c3 = arith.constant 3 : index
    %c0_3 = arith.constant 0 : index
    %3 = vector.load %arg2[%c3, %c0_3] : memref<8x128xf32, #tpu.memory_space<vmem>>, vector<1x1xf32>
    %c0_4 = arith.constant 0 : index
    %c0_5 = arith.constant 0 : index
    %c0_6 = arith.constant 0 : index
    %4 = vector.load %arg0[%c0_4, %c0_5, %c0_6] : memref<40x8x1xf32, #tpu.memory_space<vmem>>, vector<40x8x1xf32>
    %5 = vector.shape_cast %0 : vector<1x128xf32> to vector<1x1x128xf32>
    %6 = vector.broadcast %4 : vector<40x8x1xf32> to vector<40x8x128xf32>
    %7 = vector.broadcast %5 : vector<1x1x128xf32> to vector<40x8x128xf32>
    %8 = arith.mulf %6, %7 : vector<40x8x128xf32>
    %9 = vector.shape_cast %1 : vector<1x128xf32> to vector<1x1x128xf32>
    %10 = vector.broadcast %9 : vector<1x1x128xf32> to vector<40x8x128xf32>
    %11 = arith.addf %8, %10 : vector<40x8x128xf32>
    %c0_7 = arith.constant 0 : index
    %c0_8 = arith.constant 0 : index
    %c0_9 = arith.constant 0 : index
    %12 = vector.load %arg4[%c0_7, %c0_8, %c0_9] : memref<40x8x128xf32, #tpu.memory_space<vmem>>, vector<40x8x128xf32>
    tpu.vector_store %arg4[%c0_7, %c0_8, %c0_9], %11 {strides = array<i32>} : memref<40x8x128xf32, #tpu.memory_space<vmem>>, vector<40x8x128xf32>,
    %c0_10 = arith.constant 0 : index
    %c0_11 = arith.constant 0 : index
    %13 = vector.load %arg1[%c0_10, %c0_11] : memref<128x128xf32, #tpu.memory_space<vmem>>, vector<128x128xf32>
    %cst = arith.constant 0.000000e+00 : f32
    %14 = vector.broadcast %cst : f32 to vector<8x128xf32>
    %c0_i32 = arith.constant 0 : i32
    %cst_12 = arith.constant dense<0.000000e+00> : vector<8x128xf32>
    %15 = tpu.matmul %14, %13, %cst_12 {dimension_numbers = #tpu.dot_dimension_numbers<[1], [0], [0], [1], [0, 0, 1, 1], [], []>} : vector<8x128xf32>, vector<128x128xf32>, vector<8x128xf32> -> vector<8x128xf32>
    %16 = arith.index_cast %c0_i32 : i32 to index
    %c0_13 = arith.constant 0 : index
    %c0_14 = arith.constant 0 : index
    %17 = vector.load %arg4[%16, %c0_13, %c0_14] : memref<40x8x128xf32, #tpu.memory_space<vmem>>, vector<1x8x128xf32>
    %18 = vector.shape_cast %17 : vector<1x8x128xf32> to vector<8x128xf32>
    %19 = arith.addf %15, %18 : vector<8x128xf32>
    %20 = math.tanh %19 : vector<8x128xf32>
    %c1_i32 = arith.constant 1 : i32
    %cst_15 = arith.constant dense<0.000000e+00> : vector<8x128xf32>
    %21 = tpu.matmul %20, %13, %cst_15 {dimension_numbers = #tpu.dot_dimension_numbers<[1], [0], [0], [1], [0, 0, 1, 1], [], []>} : vector<8x128xf32>, vector<128x128xf32>, vector<8x128xf32> -> vector<8x128xf32>
    %22 = arith.index_cast %c1_i32 : i32 to index
    %c0_16 = arith.constant 0 : index
    %c0_17 = arith.constant 0 : index
    %23 = vector.load %arg4[%22, %c0_16, %c0_17] : memref<40x8x128xf32, #tpu.memory_space<vmem>>, vector<1x8x128xf32>
    %24 = vector.shape_cast %23 : vector<1x8x128xf32> to vector<8x128xf32>
    %25 = arith.addf %21, %24 : vector<8x128xf32>
    %26 = math.tanh %25 : vector<8x128xf32>
    %c2_i32 = arith.constant 2 : i32
    %cst_18 = arith.constant dense<0.000000e+00> : vector<8x128xf32>
    %27 = tpu.matmul %26, %13, %cst_18 {dimension_numbers = #tpu.dot_dimension_numbers<[1], [0], [0], [1], [0, 0, 1, 1], [], []>} : vector<8x128xf32>, vector<128x128xf32>, vector<8x128xf32> -> vector<8x128xf32>
    %28 = arith.index_cast %c2_i32 : i32 to index
    %c0_19 = arith.constant 0 : index
    %c0_20 = arith.constant 0 : index
    %29 = vector.load %arg4[%28, %c0_19, %c0_20] : memref<40x8x128xf32, #tpu.memory_space<vmem>>, vector<1x8x128xf32>
    %30 = vector.shape_cast %29 : vector<1x8x128xf32> to vector<8x128xf32>
    %31 = arith.addf %27, %30 : vector<8x128xf32>
    %32 = math.tanh %31 : vector<8x128xf32>
    %c3_i32 = arith.constant 3 : i32
    %cst_21 = arith.constant dense<0.000000e+00> : vector<8x128xf32>
    %33 = tpu.matmul %32, %13, %cst_21 {dimension_numbers = #tpu.dot_dimension_numbers<[1], [0], [0], [1], [0, 0, 1, 1], [], []>} : vector<8x128xf32>, vector<128x128xf32>, vector<8x128xf32> -> vector<8x128xf32>
    %34 = arith.index_cast %c3_i32 : i32 to index
    %c0_22 = arith.constant 0 : index
    %c0_23 = arith.constant 0 : index
    %35 = vector.load %arg4[%34, %c0_22, %c0_23] : memref<40x8x128xf32, #tpu.memory_space<vmem>>, vector<1x8x128xf32>
    %36 = vector.shape_cast %35 : vector<1x8x128xf32> to vector<8x128xf32>
    %37 = arith.addf %33, %36 : vector<8x128xf32>
    %38 = math.tanh %37 : vector<8x128xf32>
    %c4_i32 = arith.constant 4 : i32
    %cst_24 = arith.constant dense<0.000000e+00> : vector<8x128xf32>
    %39 = tpu.matmul %38, %13, %cst_24 {dimension_numbers = #tpu.dot_dimension_numbers<[1], [0], [0], [1], [0, 0, 1, 1], [], []>} : vector<8x128xf32>, vector<128x128xf32>, vector<8x128xf32> -> vector<8x128xf32>
    %40 = arith.index_cast %c4_i32 : i32 to index
    %c0_25 = arith.constant 0 : index
    %c0_26 = arith.constant 0 : index
    %41 = vector.load %arg4[%40, %c0_25, %c0_26] : memref<40x8x128xf32, #tpu.memory_space<vmem>>, vector<1x8x128xf32>
    %42 = vector.shape_cast %41 : vector<1x8x128xf32> to vector<8x128xf32>
    %43 = arith.addf %39, %42 : vector<8x128xf32>
    %44 = math.tanh %43 : vector<8x128xf32>
    %c5_i32 = arith.constant 5 : i32
    %cst_27 = arith.constant dense<0.000000e+00> : vector<8x128xf32>
    %45 = tpu.matmul %44, %13, %cst_27 {dimension_numbers = #tpu.dot_dimension_numbers<[1], [0], [0], [1], [0, 0, 1, 1], [], []>} : vector<8x128xf32>, vector<128x128xf32>, vector<8x128xf32> -> vector<8x128xf32>
    %46 = arith.index_cast %c5_i32 : i32 to index
    %c0_28 = arith.constant 0 : index
    %c0_29 = arith.constant 0 : index
    %47 = vector.load %arg4[%46, %c0_28, %c0_29] : memref<40x8x128xf32, #tpu.memory_space<vmem>>, vector<1x8x128xf32>
    %48 = vector.shape_cast %47 : vector<1x8x128xf32> to vector<8x128xf32>
    %49 = arith.addf %45, %48 : vector<8x128xf32>
    %50 = math.tanh %49 : vector<8x128xf32>
    %c6_i32 = arith.constant 6 : i32
    %cst_30 = arith.constant dense<0.000000e+00> : vector<8x128xf32>
    %51 = tpu.matmul %50, %13, %cst_30 {dimension_numbers = #tpu.dot_dimension_numbers<[1], [0], [0], [1], [0, 0, 1, 1], [], []>} : vector<8x128xf32>, vector<128x128xf32>, vector<8x128xf32> -> vector<8x128xf32>
    %52 = arith.index_cast %c6_i32 : i32 to index
    %c0_31 = arith.constant 0 : index
    %c0_32 = arith.constant 0 : index
    %53 = vector.load %arg4[%52, %c0_31, %c0_32] : memref<40x8x128xf32, #tpu.memory_space<vmem>>, vector<1x8x128xf32>
    %54 = vector.shape_cast %53 : vector<1x8x128xf32> to vector<8x128xf32>
    %55 = arith.addf %51, %54 : vector<8x128xf32>
    %56 = math.tanh %55 : vector<8x128xf32>
    %c7_i32 = arith.constant 7 : i32
    %cst_33 = arith.constant dense<0.000000e+00> : vector<8x128xf32>
    %57 = tpu.matmul %56, %13, %cst_33 {dimension_numbers = #tpu.dot_dimension_numbers<[1], [0], [0], [1], [0, 0, 1, 1], [], []>} : vector<8x128xf32>, vector<128x128xf32>, vector<8x128xf32> -> vector<8x128xf32>
    %58 = arith.index_cast %c7_i32 : i32 to index
    %c0_34 = arith.constant 0 : index
    %c0_35 = arith.constant 0 : index
    %59 = vector.load %arg4[%58, %c0_34, %c0_35] : memref<40x8x128xf32, #tpu.memory_space<vmem>>, vector<1x8x128xf32>
    %60 = vector.shape_cast %59 : vector<1x8x128xf32> to vector<8x128xf32>
    %61 = arith.addf %57, %60 : vector<8x128xf32>
    %62 = math.tanh %61 : vector<8x128xf32>
    %c8_i32 = arith.constant 8 : i32
    %cst_36 = arith.constant dense<0.000000e+00> : vector<8x128xf32>
    %63 = tpu.matmul %62, %13, %cst_36 {dimension_numbers = #tpu.dot_dimension_numbers<[1], [0], [0], [1], [0, 0, 1, 1], [], []>} : vector<8x128xf32>, vector<128x128xf32>, vector<8x128xf32> -> vector<8x128xf32>
    %64 = arith.index_cast %c8_i32 : i32 to index
    %c0_37 = arith.constant 0 : index
    %c0_38 = arith.constant 0 : index
    %65 = vector.load %arg4[%64, %c0_37, %c0_38] : memref<40x8x128xf32, #tpu.memory_space<vmem>>, vector<1x8x128xf32>
    %66 = vector.shape_cast %65 : vector<1x8x128xf32> to vector<8x128xf32>
    %67 = arith.addf %63, %66 : vector<8x128xf32>
    %68 = math.tanh %67 : vector<8x128xf32>
    %c9_i32 = arith.constant 9 : i32
    %cst_39 = arith.constant dense<0.000000e+00> : vector<8x128xf32>
    %69 = tpu.matmul %68, %13, %cst_39 {dimension_numbers = #tpu.dot_dimension_numbers<[1], [0], [0], [1], [0, 0, 1, 1], [], []>} : vector<8x128xf32>, vector<128x128xf32>, vector<8x128xf32> -> vector<8x128xf32>
    %70 = arith.index_cast %c9_i32 : i32 to index
    %c0_40 = arith.constant 0 : index
    %c0_41 = arith.constant 0 : index
    %71 = vector.load %arg4[%70, %c0_40, %c0_41] : memref<40x8x128xf32, #tpu.memory_space<vmem>>, vector<1x8x128xf32>
    %72 = vector.shape_cast %71 : vector<1x8x128xf32> to vector<8x128xf32>
    %73 = arith.addf %69, %72 : vector<8x128xf32>
    %74 = math.tanh %73 : vector<8x128xf32>
    %c10_i32 = arith.constant 10 : i32
    %cst_42 = arith.constant dense<0.000000e+00> : vector<8x128xf32>
    %75 = tpu.matmul %74, %13, %cst_42 {dimension_numbers = #tpu.dot_dimension_numbers<[1], [0], [0], [1], [0, 0, 1, 1], [], []>} : vector<8x128xf32>, vector<128x128xf32>, vector<8x128xf32> -> vector<8x128xf32>
    %76 = arith.index_cast %c10_i32 : i32 to index
    %c0_43 = arith.constant 0 : index
    %c0_44 = arith.constant 0 : index
    %77 = vector.load %arg4[%76, %c0_43, %c0_44] : memref<40x8x128xf32, #tpu.memory_space<vmem>>, vector<1x8x128xf32>
    %78 = vector.shape_cast %77 : vector<1x8x128xf32> to vector<8x128xf32>
    %79 = arith.addf %75, %78 : vector<8x128xf32>
    %80 = math.tanh %79 : vector<8x128xf32>
    %c11_i32 = arith.constant 11 : i32
    %cst_45 = arith.constant dense<0.000000e+00> : vector<8x128xf32>
    %81 = tpu.matmul %80, %13, %cst_45 {dimension_numbers = #tpu.dot_dimension_numbers<[1], [0], [0], [1], [0, 0, 1, 1], [], []>} : vector<8x128xf32>, vector<128x128xf32>, vector<8x128xf32> -> vector<8x128xf32>
    %82 = arith.index_cast %c11_i32 : i32 to index
    %c0_46 = arith.constant 0 : index
    %c0_47 = arith.constant 0 : index
    %83 = vector.load %arg4[%82, %c0_46, %c0_47] : memref<40x8x128xf32, #tpu.memory_space<vmem>>, vector<1x8x128xf32>
    %84 = vector.shape_cast %83 : vector<1x8x128xf32> to vector<8x128xf32>
    %85 = arith.addf %81, %84 : vector<8x128xf32>
    %86 = math.tanh %85 : vector<8x128xf32>
    %c12_i32 = arith.constant 12 : i32
    %cst_48 = arith.constant dense<0.000000e+00> : vector<8x128xf32>
    %87 = tpu.matmul %86, %13, %cst_48 {dimension_numbers = #tpu.dot_dimension_numbers<[1], [0], [0], [1], [0, 0, 1, 1], [], []>} : vector<8x128xf32>, vector<128x128xf32>, vector<8x128xf32> -> vector<8x128xf32>
    %88 = arith.index_cast %c12_i32 : i32 to index
    %c0_49 = arith.constant 0 : index
    %c0_50 = arith.constant 0 : index
    %89 = vector.load %arg4[%88, %c0_49, %c0_50] : memref<40x8x128xf32, #tpu.memory_space<vmem>>, vector<1x8x128xf32>
    %90 = vector.shape_cast %89 : vector<1x8x128xf32> to vector<8x128xf32>
    %91 = arith.addf %87, %90 : vector<8x128xf32>
    %92 = math.tanh %91 : vector<8x128xf32>
    %c13_i32 = arith.constant 13 : i32
    %cst_51 = arith.constant dense<0.000000e+00> : vector<8x128xf32>
    %93 = tpu.matmul %92, %13, %cst_51 {dimension_numbers = #tpu.dot_dimension_numbers<[1], [0], [0], [1], [0, 0, 1, 1], [], []>} : vector<8x128xf32>, vector<128x128xf32>, vector<8x128xf32> -> vector<8x128xf32>
    %94 = arith.index_cast %c13_i32 : i32 to index
    %c0_52 = arith.constant 0 : index
    %c0_53 = arith.constant 0 : index
    %95 = vector.load %arg4[%94, %c0_52, %c0_53] : memref<40x8x128xf32, #tpu.memory_space<vmem>>, vector<1x8x128xf32>
    %96 = vector.shape_cast %95 : vector<1x8x128xf32> to vector<8x128xf32>
    %97 = arith.addf %93, %96 : vector<8x128xf32>
    %98 = math.tanh %97 : vector<8x128xf32>
    %c14_i32 = arith.constant 14 : i32
    %cst_54 = arith.constant dense<0.000000e+00> : vector<8x128xf32>
    %99 = tpu.matmul %98, %13, %cst_54 {dimension_numbers = #tpu.dot_dimension_numbers<[1], [0], [0], [1], [0, 0, 1, 1], [], []>} : vector<8x128xf32>, vector<128x128xf32>, vector<8x128xf32> -> vector<8x128xf32>
    %100 = arith.index_cast %c14_i32 : i32 to index
    %c0_55 = arith.constant 0 : index
    %c0_56 = arith.constant 0 : index
    %101 = vector.load %arg4[%100, %c0_55, %c0_56] : memref<40x8x128xf32, #tpu.memory_space<vmem>>, vector<1x8x128xf32>
    %102 = vector.shape_cast %101 : vector<1x8x128xf32> to vector<8x128xf32>
    %103 = arith.addf %99, %102 : vector<8x128xf32>
    %104 = math.tanh %103 : vector<8x128xf32>
    %c15_i32 = arith.constant 15 : i32
    %cst_57 = arith.constant dense<0.000000e+00> : vector<8x128xf32>
    %105 = tpu.matmul %104, %13, %cst_57 {dimension_numbers = #tpu.dot_dimension_numbers<[1], [0], [0], [1], [0, 0, 1, 1], [], []>} : vector<8x128xf32>, vector<128x128xf32>, vector<8x128xf32> -> vector<8x128xf32>
    %106 = arith.index_cast %c15_i32 : i32 to index
    %c0_58 = arith.constant 0 : index
    %c0_59 = arith.constant 0 : index
    %107 = vector.load %arg4[%106, %c0_58, %c0_59] : memref<40x8x128xf32, #tpu.memory_space<vmem>>, vector<1x8x128xf32>
    %108 = vector.shape_cast %107 : vector<1x8x128xf32> to vector<8x128xf32>
    %109 = arith.addf %105, %108 : vector<8x128xf32>
    %110 = math.tanh %109 : vector<8x128xf32>
    %c16_i32 = arith.constant 16 : i32
    %cst_60 = arith.constant dense<0.000000e+00> : vector<8x128xf32>
    %111 = tpu.matmul %110, %13, %cst_60 {dimension_numbers = #tpu.dot_dimension_numbers<[1], [0], [0], [1], [0, 0, 1, 1], [], []>} : vector<8x128xf32>, vector<128x128xf32>, vector<8x128xf32> -> vector<8x128xf32>
    %112 = arith.index_cast %c16_i32 : i32 to index
    %c0_61 = arith.constant 0 : index
    %c0_62 = arith.constant 0 : index
    %113 = vector.load %arg4[%112, %c0_61, %c0_62] : memref<40x8x128xf32, #tpu.memory_space<vmem>>, vector<1x8x128xf32>
    %114 = vector.shape_cast %113 : vector<1x8x128xf32> to vector<8x128xf32>
    %115 = arith.addf %111, %114 : vector<8x128xf32>
    %116 = math.tanh %115 : vector<8x128xf32>
    %c17_i32 = arith.constant 17 : i32
    %cst_63 = arith.constant dense<0.000000e+00> : vector<8x128xf32>
    %117 = tpu.matmul %116, %13, %cst_63 {dimension_numbers = #tpu.dot_dimension_numbers<[1], [0], [0], [1], [0, 0, 1, 1], [], []>} : vector<8x128xf32>, vector<128x128xf32>, vector<8x128xf32> -> vector<8x128xf32>
    %118 = arith.index_cast %c17_i32 : i32 to index
    %c0_64 = arith.constant 0 : index
    %c0_65 = arith.constant 0 : index
    %119 = vector.load %arg4[%118, %c0_64, %c0_65] : memref<40x8x128xf32, #tpu.memory_space<vmem>>, vector<1x8x128xf32>
    %120 = vector.shape_cast %119 : vector<1x8x128xf32> to vector<8x128xf32>
    %121 = arith.addf %117, %120 : vector<8x128xf32>
    %122 = math.tanh %121 : vector<8x128xf32>
    %c18_i32 = arith.constant 18 : i32
    %cst_66 = arith.constant dense<0.000000e+00> : vector<8x128xf32>
    %123 = tpu.matmul %122, %13, %cst_66 {dimension_numbers = #tpu.dot_dimension_numbers<[1], [0], [0], [1], [0, 0, 1, 1], [], []>} : vector<8x128xf32>, vector<128x128xf32>, vector<8x128xf32> -> vector<8x128xf32>
    %124 = arith.index_cast %c18_i32 : i32 to index
    %c0_67 = arith.constant 0 : index
    %c0_68 = arith.constant 0 : index
    %125 = vector.load %arg4[%124, %c0_67, %c0_68] : memref<40x8x128xf32, #tpu.memory_space<vmem>>, vector<1x8x128xf32>
    %126 = vector.shape_cast %125 : vector<1x8x128xf32> to vector<8x128xf32>
    %127 = arith.addf %123, %126 : vector<8x128xf32>
    %128 = math.tanh %127 : vector<8x128xf32>
    %c19_i32 = arith.constant 19 : i32
    %cst_69 = arith.constant dense<0.000000e+00> : vector<8x128xf32>
    %129 = tpu.matmul %128, %13, %cst_69 {dimension_numbers = #tpu.dot_dimension_numbers<[1], [0], [0], [1], [0, 0, 1, 1], [], []>} : vector<8x128xf32>, vector<128x128xf32>, vector<8x128xf32> -> vector<8x128xf32>
    %130 = arith.index_cast %c19_i32 : i32 to index
    %c0_70 = arith.constant 0 : index
    %c0_71 = arith.constant 0 : index
    %131 = vector.load %arg4[%130, %c0_70, %c0_71] : memref<40x8x128xf32, #tpu.memory_space<vmem>>, vector<1x8x128xf32>
    %132 = vector.shape_cast %131 : vector<1x8x128xf32> to vector<8x128xf32>
    %133 = arith.addf %129, %132 : vector<8x128xf32>
    %134 = math.tanh %133 : vector<8x128xf32>
    %c20_i32 = arith.constant 20 : i32
    %cst_72 = arith.constant dense<0.000000e+00> : vector<8x128xf32>
    %135 = tpu.matmul %134, %13, %cst_72 {dimension_numbers = #tpu.dot_dimension_numbers<[1], [0], [0], [1], [0, 0, 1, 1], [], []>} : vector<8x128xf32>, vector<128x128xf32>, vector<8x128xf32> -> vector<8x128xf32>
    %136 = arith.index_cast %c20_i32 : i32 to index
    %c0_73 = arith.constant 0 : index
    %c0_74 = arith.constant 0 : index
    %137 = vector.load %arg4[%136, %c0_73, %c0_74] : memref<40x8x128xf32, #tpu.memory_space<vmem>>, vector<1x8x128xf32>
    %138 = vector.shape_cast %137 : vector<1x8x128xf32> to vector<8x128xf32>
    %139 = arith.addf %135, %138 : vector<8x128xf32>
    %140 = math.tanh %139 : vector<8x128xf32>
    %c21_i32 = arith.constant 21 : i32
    %cst_75 = arith.constant dense<0.000000e+00> : vector<8x128xf32>
    %141 = tpu.matmul %140, %13, %cst_75 {dimension_numbers = #tpu.dot_dimension_numbers<[1], [0], [0], [1], [0, 0, 1, 1], [], []>} : vector<8x128xf32>, vector<128x128xf32>, vector<8x128xf32> -> vector<8x128xf32>
    %142 = arith.index_cast %c21_i32 : i32 to index
    %c0_76 = arith.constant 0 : index
    %c0_77 = arith.constant 0 : index
    %143 = vector.load %arg4[%142, %c0_76, %c0_77] : memref<40x8x128xf32, #tpu.memory_space<vmem>>, vector<1x8x128xf32>
    %144 = vector.shape_cast %143 : vector<1x8x128xf32> to vector<8x128xf32>
    %145 = arith.addf %141, %144 : vector<8x128xf32>
    %146 = math.tanh %145 : vector<8x128xf32>
    %c22_i32 = arith.constant 22 : i32
    %cst_78 = arith.constant dense<0.000000e+00> : vector<8x128xf32>
    %147 = tpu.matmul %146, %13, %cst_78 {dimension_numbers = #tpu.dot_dimension_numbers<[1], [0], [0], [1], [0, 0, 1, 1], [], []>} : vector<8x128xf32>, vector<128x128xf32>, vector<8x128xf32> -> vector<8x128xf32>
    %148 = arith.index_cast %c22_i32 : i32 to index
    %c0_79 = arith.constant 0 : index
    %c0_80 = arith.constant 0 : index
    %149 = vector.load %arg4[%148, %c0_79, %c0_80] : memref<40x8x128xf32, #tpu.memory_space<vmem>>, vector<1x8x128xf32>
    %150 = vector.shape_cast %149 : vector<1x8x128xf32> to vector<8x128xf32>
    %151 = arith.addf %147, %150 : vector<8x128xf32>
    %152 = math.tanh %151 : vector<8x128xf32>
    %c23_i32 = arith.constant 23 : i32
    %cst_81 = arith.constant dense<0.000000e+00> : vector<8x128xf32>
    %153 = tpu.matmul %152, %13, %cst_81 {dimension_numbers = #tpu.dot_dimension_numbers<[1], [0], [0], [1], [0, 0, 1, 1], [], []>} : vector<8x128xf32>, vector<128x128xf32>, vector<8x128xf32> -> vector<8x128xf32>
    %154 = arith.index_cast %c23_i32 : i32 to index
    %c0_82 = arith.constant 0 : index
    %c0_83 = arith.constant 0 : index
    %155 = vector.load %arg4[%154, %c0_82, %c0_83] : memref<40x8x128xf32, #tpu.memory_space<vmem>>, vector<1x8x128xf32>
    %156 = vector.shape_cast %155 : vector<1x8x128xf32> to vector<8x128xf32>
    %157 = arith.addf %153, %156 : vector<8x128xf32>
    %158 = math.tanh %157 : vector<8x128xf32>
    %c24_i32 = arith.constant 24 : i32
    %cst_84 = arith.constant dense<0.000000e+00> : vector<8x128xf32>
    %159 = tpu.matmul %158, %13, %cst_84 {dimension_numbers = #tpu.dot_dimension_numbers<[1], [0], [0], [1], [0, 0, 1, 1], [], []>} : vector<8x128xf32>, vector<128x128xf32>, vector<8x128xf32> -> vector<8x128xf32>
    %160 = arith.index_cast %c24_i32 : i32 to index
    %c0_85 = arith.constant 0 : index
    %c0_86 = arith.constant 0 : index
    %161 = vector.load %arg4[%160, %c0_85, %c0_86] : memref<40x8x128xf32, #tpu.memory_space<vmem>>, vector<1x8x128xf32>
    %162 = vector.shape_cast %161 : vector<1x8x128xf32> to vector<8x128xf32>
    %163 = arith.addf %159, %162 : vector<8x128xf32>
    %164 = math.tanh %163 : vector<8x128xf32>
    %c25_i32 = arith.constant 25 : i32
    %cst_87 = arith.constant dense<0.000000e+00> : vector<8x128xf32>
    %165 = tpu.matmul %164, %13, %cst_87 {dimension_numbers = #tpu.dot_dimension_numbers<[1], [0], [0], [1], [0, 0, 1, 1], [], []>} : vector<8x128xf32>, vector<128x128xf32>, vector<8x128xf32> -> vector<8x128xf32>
    %166 = arith.index_cast %c25_i32 : i32 to index
    %c0_88 = arith.constant 0 : index
    %c0_89 = arith.constant 0 : index
    %167 = vector.load %arg4[%166, %c0_88, %c0_89] : memref<40x8x128xf32, #tpu.memory_space<vmem>>, vector<1x8x128xf32>
    %168 = vector.shape_cast %167 : vector<1x8x128xf32> to vector<8x128xf32>
    %169 = arith.addf %165, %168 : vector<8x128xf32>
    %170 = math.tanh %169 : vector<8x128xf32>
    %c26_i32 = arith.constant 26 : i32
    %cst_90 = arith.constant dense<0.000000e+00> : vector<8x128xf32>
    %171 = tpu.matmul %170, %13, %cst_90 {dimension_numbers = #tpu.dot_dimension_numbers<[1], [0], [0], [1], [0, 0, 1, 1], [], []>} : vector<8x128xf32>, vector<128x128xf32>, vector<8x128xf32> -> vector<8x128xf32>
    %172 = arith.index_cast %c26_i32 : i32 to index
    %c0_91 = arith.constant 0 : index
    %c0_92 = arith.constant 0 : index
    %173 = vector.load %arg4[%172, %c0_91, %c0_92] : memref<40x8x128xf32, #tpu.memory_space<vmem>>, vector<1x8x128xf32>
    %174 = vector.shape_cast %173 : vector<1x8x128xf32> to vector<8x128xf32>
    %175 = arith.addf %171, %174 : vector<8x128xf32>
    %176 = math.tanh %175 : vector<8x128xf32>
    %c27_i32 = arith.constant 27 : i32
    %cst_93 = arith.constant dense<0.000000e+00> : vector<8x128xf32>
    %177 = tpu.matmul %176, %13, %cst_93 {dimension_numbers = #tpu.dot_dimension_numbers<[1], [0], [0], [1], [0, 0, 1, 1], [], []>} : vector<8x128xf32>, vector<128x128xf32>, vector<8x128xf32> -> vector<8x128xf32>
    %178 = arith.index_cast %c27_i32 : i32 to index
    %c0_94 = arith.constant 0 : index
    %c0_95 = arith.constant 0 : index
    %179 = vector.load %arg4[%178, %c0_94, %c0_95] : memref<40x8x128xf32, #tpu.memory_space<vmem>>, vector<1x8x128xf32>
    %180 = vector.shape_cast %179 : vector<1x8x128xf32> to vector<8x128xf32>
    %181 = arith.addf %177, %180 : vector<8x128xf32>
    %182 = math.tanh %181 : vector<8x128xf32>
    %c28_i32 = arith.constant 28 : i32
    %cst_96 = arith.constant dense<0.000000e+00> : vector<8x128xf32>
    %183 = tpu.matmul %182, %13, %cst_96 {dimension_numbers = #tpu.dot_dimension_numbers<[1], [0], [0], [1], [0, 0, 1, 1], [], []>} : vector<8x128xf32>, vector<128x128xf32>, vector<8x128xf32> -> vector<8x128xf32>
    %184 = arith.index_cast %c28_i32 : i32 to index
    %c0_97 = arith.constant 0 : index
    %c0_98 = arith.constant 0 : index
    %185 = vector.load %arg4[%184, %c0_97, %c0_98] : memref<40x8x128xf32, #tpu.memory_space<vmem>>, vector<1x8x128xf32>
    %186 = vector.shape_cast %185 : vector<1x8x128xf32> to vector<8x128xf32>
    %187 = arith.addf %183, %186 : vector<8x128xf32>
    %188 = math.tanh %187 : vector<8x128xf32>
    %c29_i32 = arith.constant 29 : i32
    %cst_99 = arith.constant dense<0.000000e+00> : vector<8x128xf32>
    %189 = tpu.matmul %188, %13, %cst_99 {dimension_numbers = #tpu.dot_dimension_numbers<[1], [0], [0], [1], [0, 0, 1, 1], [], []>} : vector<8x128xf32>, vector<128x128xf32>, vector<8x128xf32> -> vector<8x128xf32>
    %190 = arith.index_cast %c29_i32 : i32 to index
    %c0_100 = arith.constant 0 : index
    %c0_101 = arith.constant 0 : index
    %191 = vector.load %arg4[%190, %c0_100, %c0_101] : memref<40x8x128xf32, #tpu.memory_space<vmem>>, vector<1x8x128xf32>
    %192 = vector.shape_cast %191 : vector<1x8x128xf32> to vector<8x128xf32>
    %193 = arith.addf %189, %192 : vector<8x128xf32>
    %194 = math.tanh %193 : vector<8x128xf32>
    %c30_i32 = arith.constant 30 : i32
    %cst_102 = arith.constant dense<0.000000e+00> : vector<8x128xf32>
    %195 = tpu.matmul %194, %13, %cst_102 {dimension_numbers = #tpu.dot_dimension_numbers<[1], [0], [0], [1], [0, 0, 1, 1], [], []>} : vector<8x128xf32>, vector<128x128xf32>, vector<8x128xf32> -> vector<8x128xf32>
    %196 = arith.index_cast %c30_i32 : i32 to index
    %c0_103 = arith.constant 0 : index
    %c0_104 = arith.constant 0 : index
    %197 = vector.load %arg4[%196, %c0_103, %c0_104] : memref<40x8x128xf32, #tpu.memory_space<vmem>>, vector<1x8x128xf32>
    %198 = vector.shape_cast %197 : vector<1x8x128xf32> to vector<8x128xf32>
    %199 = arith.addf %195, %198 : vector<8x128xf32>
    %200 = math.tanh %199 : vector<8x128xf32>
    %c31_i32 = arith.constant 31 : i32
    %cst_105 = arith.constant dense<0.000000e+00> : vector<8x128xf32>
    %201 = tpu.matmul %200, %13, %cst_105 {dimension_numbers = #tpu.dot_dimension_numbers<[1], [0], [0], [1], [0, 0, 1, 1], [], []>} : vector<8x128xf32>, vector<128x128xf32>, vector<8x128xf32> -> vector<8x128xf32>
    %202 = arith.index_cast %c31_i32 : i32 to index
    %c0_106 = arith.constant 0 : index
    %c0_107 = arith.constant 0 : index
    %203 = vector.load %arg4[%202, %c0_106, %c0_107] : memref<40x8x128xf32, #tpu.memory_space<vmem>>, vector<1x8x128xf32>
    %204 = vector.shape_cast %203 : vector<1x8x128xf32> to vector<8x128xf32>
    %205 = arith.addf %201, %204 : vector<8x128xf32>
    %206 = math.tanh %205 : vector<8x128xf32>
    %c32_i32 = arith.constant 32 : i32
    %cst_108 = arith.constant dense<0.000000e+00> : vector<8x128xf32>
    %207 = tpu.matmul %206, %13, %cst_108 {dimension_numbers = #tpu.dot_dimension_numbers<[1], [0], [0], [1], [0, 0, 1, 1], [], []>} : vector<8x128xf32>, vector<128x128xf32>, vector<8x128xf32> -> vector<8x128xf32>
    %208 = arith.index_cast %c32_i32 : i32 to index
    %c0_109 = arith.constant 0 : index
    %c0_110 = arith.constant 0 : index
    %209 = vector.load %arg4[%208, %c0_109, %c0_110] : memref<40x8x128xf32, #tpu.memory_space<vmem>>, vector<1x8x128xf32>
    %210 = vector.shape_cast %209 : vector<1x8x128xf32> to vector<8x128xf32>
    %211 = arith.addf %207, %210 : vector<8x128xf32>
    %212 = math.tanh %211 : vector<8x128xf32>
    %c33_i32 = arith.constant 33 : i32
    %cst_111 = arith.constant dense<0.000000e+00> : vector<8x128xf32>
    %213 = tpu.matmul %212, %13, %cst_111 {dimension_numbers = #tpu.dot_dimension_numbers<[1], [0], [0], [1], [0, 0, 1, 1], [], []>} : vector<8x128xf32>, vector<128x128xf32>, vector<8x128xf32> -> vector<8x128xf32>
    %214 = arith.index_cast %c33_i32 : i32 to index
    %c0_112 = arith.constant 0 : index
    %c0_113 = arith.constant 0 : index
    %215 = vector.load %arg4[%214, %c0_112, %c0_113] : memref<40x8x128xf32, #tpu.memory_space<vmem>>, vector<1x8x128xf32>
    %216 = vector.shape_cast %215 : vector<1x8x128xf32> to vector<8x128xf32>
    %217 = arith.addf %213, %216 : vector<8x128xf32>
    %218 = math.tanh %217 : vector<8x128xf32>
    %c34_i32 = arith.constant 34 : i32
    %cst_114 = arith.constant dense<0.000000e+00> : vector<8x128xf32>
    %219 = tpu.matmul %218, %13, %cst_114 {dimension_numbers = #tpu.dot_dimension_numbers<[1], [0], [0], [1], [0, 0, 1, 1], [], []>} : vector<8x128xf32>, vector<128x128xf32>, vector<8x128xf32> -> vector<8x128xf32>
    %220 = arith.index_cast %c34_i32 : i32 to index
    %c0_115 = arith.constant 0 : index
    %c0_116 = arith.constant 0 : index
    %221 = vector.load %arg4[%220, %c0_115, %c0_116] : memref<40x8x128xf32, #tpu.memory_space<vmem>>, vector<1x8x128xf32>
    %222 = vector.shape_cast %221 : vector<1x8x128xf32> to vector<8x128xf32>
    %223 = arith.addf %219, %222 : vector<8x128xf32>
    %224 = math.tanh %223 : vector<8x128xf32>
    %c35_i32 = arith.constant 35 : i32
    %cst_117 = arith.constant dense<0.000000e+00> : vector<8x128xf32>
    %225 = tpu.matmul %224, %13, %cst_117 {dimension_numbers = #tpu.dot_dimension_numbers<[1], [0], [0], [1], [0, 0, 1, 1], [], []>} : vector<8x128xf32>, vector<128x128xf32>, vector<8x128xf32> -> vector<8x128xf32>
    %226 = arith.index_cast %c35_i32 : i32 to index
    %c0_118 = arith.constant 0 : index
    %c0_119 = arith.constant 0 : index
    %227 = vector.load %arg4[%226, %c0_118, %c0_119] : memref<40x8x128xf32, #tpu.memory_space<vmem>>, vector<1x8x128xf32>
    %228 = vector.shape_cast %227 : vector<1x8x128xf32> to vector<8x128xf32>
    %229 = arith.addf %225, %228 : vector<8x128xf32>
    %230 = math.tanh %229 : vector<8x128xf32>
    %c36_i32 = arith.constant 36 : i32
    %cst_120 = arith.constant dense<0.000000e+00> : vector<8x128xf32>
    %231 = tpu.matmul %230, %13, %cst_120 {dimension_numbers = #tpu.dot_dimension_numbers<[1], [0], [0], [1], [0, 0, 1, 1], [], []>} : vector<8x128xf32>, vector<128x128xf32>, vector<8x128xf32> -> vector<8x128xf32>
    %232 = arith.index_cast %c36_i32 : i32 to index
    %c0_121 = arith.constant 0 : index
    %c0_122 = arith.constant 0 : index
    %233 = vector.load %arg4[%232, %c0_121, %c0_122] : memref<40x8x128xf32, #tpu.memory_space<vmem>>, vector<1x8x128xf32>
    %234 = vector.shape_cast %233 : vector<1x8x128xf32> to vector<8x128xf32>
    %235 = arith.addf %231, %234 : vector<8x128xf32>
    %236 = math.tanh %235 : vector<8x128xf32>
    %c37_i32 = arith.constant 37 : i32
    %cst_123 = arith.constant dense<0.000000e+00> : vector<8x128xf32>
    %237 = tpu.matmul %236, %13, %cst_123 {dimension_numbers = #tpu.dot_dimension_numbers<[1], [0], [0], [1], [0, 0, 1, 1], [], []>} : vector<8x128xf32>, vector<128x128xf32>, vector<8x128xf32> -> vector<8x128xf32>
    %238 = arith.index_cast %c37_i32 : i32 to index
    %c0_124 = arith.constant 0 : index
    %c0_125 = arith.constant 0 : index
    %239 = vector.load %arg4[%238, %c0_124, %c0_125] : memref<40x8x128xf32, #tpu.memory_space<vmem>>, vector<1x8x128xf32>
    %240 = vector.shape_cast %239 : vector<1x8x128xf32> to vector<8x128xf32>
    %241 = arith.addf %237, %240 : vector<8x128xf32>
    %242 = math.tanh %241 : vector<8x128xf32>
    %c38_i32 = arith.constant 38 : i32
    %cst_126 = arith.constant dense<0.000000e+00> : vector<8x128xf32>
    %243 = tpu.matmul %242, %13, %cst_126 {dimension_numbers = #tpu.dot_dimension_numbers<[1], [0], [0], [1], [0, 0, 1, 1], [], []>} : vector<8x128xf32>, vector<128x128xf32>, vector<8x128xf32> -> vector<8x128xf32>
    %244 = arith.index_cast %c38_i32 : i32 to index
    %c0_127 = arith.constant 0 : index
    %c0_128 = arith.constant 0 : index
    %245 = vector.load %arg4[%244, %c0_127, %c0_128] : memref<40x8x128xf32, #tpu.memory_space<vmem>>, vector<1x8x128xf32>
    %246 = vector.shape_cast %245 : vector<1x8x128xf32> to vector<8x128xf32>
    %247 = arith.addf %243, %246 : vector<8x128xf32>
    %248 = math.tanh %247 : vector<8x128xf32>
    %c39_i32 = arith.constant 39 : i32
    %cst_129 = arith.constant dense<0.000000e+00> : vector<8x128xf32>
    %249 = tpu.matmul %248, %13, %cst_129 {dimension_numbers = #tpu.dot_dimension_numbers<[1], [0], [0], [1], [0, 0, 1, 1], [], []>} : vector<8x128xf32>, vector<128x128xf32>, vector<8x128xf32> -> vector<8x128xf32>
    %250 = arith.index_cast %c39_i32 : i32 to index
    %c0_130 = arith.constant 0 : index
    %c0_131 = arith.constant 0 : index
    %251 = vector.load %arg4[%250, %c0_130, %c0_131] : memref<40x8x128xf32, #tpu.memory_space<vmem>>, vector<1x8x128xf32>
    %252 = vector.shape_cast %251 : vector<1x8x128xf32> to vector<8x128xf32>
    %253 = arith.addf %249, %252 : vector<8x128xf32>
    %254 = math.tanh %253 : vector<8x128xf32>
    %c40_i32 = arith.constant 40 : i32
    %255 = vector.broadcast %2 : vector<1x128xf32> to vector<8x128xf32>
    %256 = arith.mulf %254, %255 : vector<8x128xf32>
    %cst_132 = arith.constant dense<0.000000e+00> : vector<8xf32>
    %257 = vector.multi_reduction <add>, %256, %cst_132 [1] : vector<8x128xf32> to vector<8xf32>
    %258 = vector.shape_cast %257 : vector<8xf32> to vector<8x1xf32>
    %259 = vector.broadcast %3 : vector<1x1xf32> to vector<8x1xf32>
    %260 = arith.addf %258, %259 : vector<8x1xf32>
    %c0_133 = arith.constant 0 : index
    %c0_134 = arith.constant 0 : index
    %261 = vector.load %arg3[%c0_133, %c0_134] : memref<8x1xf32, #tpu.memory_space<vmem>>, vector<8x1xf32>
    tpu.vector_store %arg3[%c0_133, %c0_134], %260 {strides = array<i32>} : memref<8x1xf32, #tpu.memory_space<vmem>>, vector<8x1xf32>,
    return
  }
}

</mosaic_0001>

<llo_original>
// kernel: tpu_custom_call.1
$region0: #{tpu_custom_call.1}
  #allocation0 [shape = 'u32[]', space=smem, size = 0x4, offset = 0x4, fixed_abs, tag = 'smem constant byte address 0x4 - core index']
  #allocation1 [shape = 'u32[72,128]{1,0:T(1,128)}', space=vmem, size = 0x9000, scoped, tag = 'internal scratch']
  #allocation2 [shape = 'f32[40,8,128]{2,1,0:T(8,128)}', space=vmem, size = 0x28000, scoped, tag = 'scratch operand']
  %s0 = inlined_call_operand.vmem [shape: f32[40,8,1], index: 0, kind: input, shape index: {}]
  %s1 = inlined_call_operand.vmem [shape: f32[128,128], index: 1, kind: input, shape index: {}]
  %s2 = inlined_call_operand.vmem [shape: f32[8,128], index: 2, kind: input, shape index: {}]
  %s3 = inlined_call_operand.vmem [shape: f32[8,1], index: 3, kind: output, shape index: {}]
  %s4 = sld [smem:[#allocation0]]
  $region22: #{tpu_custom_call.1} parent=0
    _
  %s6 = ssub.s32 1, %s4
  %s7 = scalar_select 0, %s6, %s4
  // Predicated region
  $region2: #{tpu_custom_call.1} parent=0 // pred_check
    _
  $region3: #{tpu_custom_call.1} parent=0 // pred_check_branch
    %9 = sbr.rel (0) target = $region5
  $region4: #{tpu_custom_call.1} parent=0 // pred_region
    _
  $region5: #{tpu_custom_call.1} parent=0 // pred_fallthru
    _
  // Predicated region
  $region6: #{tpu_custom_call.1} parent=0 // pred_check
    _
  $region7: #{tpu_custom_call.1} parent=0 // pred_check_branch
    %11 = sbr.rel (0) target = $region9
  $region8: #{tpu_custom_call.1} parent=0 // pred_region
    _
  $region9: #{tpu_custom_call.1} parent=0 // pred_fallthru
    _
  // Predicated region
  $region10: #{tpu_custom_call.1} parent=0 // pred_check
    _
  $region11: #{tpu_custom_call.1} parent=0 // pred_check_branch
    %13 = sbr.rel (0) target = $region13
  $region12: #{tpu_custom_call.1} parent=0 // pred_region
    _
  $region13: #{tpu_custom_call.1} parent=0 // pred_fallthru
    _
  %v14 = vld [vmem:[%s2] sm:$0x1]
  %v15 = vld [vmem:[%s2 + $0x1] sm:$0x1]
  %v16 = vld [vmem:[%s2 + $0x2] sm:$0x1]
  %v17 = vld [vmem:[%s2 + $0x3] sm:$0x1]
  %v18 = vld [vmem:[%s0] sm:$0xff]
  %v19 = vld [vmem:[%s0 + $0x8] sm:$0xff]
  %v20 = vld [vmem:[%s0 + $0x10] sm:$0xff]
  %v21 = vld [vmem:[%s0 + $0x18] sm:$0xff]
  %v22 = vld [vmem:[%s0 + $0x20] sm:$0xff]
  %v23 = vld [vmem:[%s0 + $0x28] sm:$0xff]
  %v24 = vld [vmem:[%s0 + $0x30] sm:$0xff]
  %v25 = vld [vmem:[%s0 + $0x38] sm:$0xff]
  %v26 = vld [vmem:[%s0 + $0x40] sm:$0xff]
  %v27 = vld [vmem:[%s0 + $0x48] sm:$0xff]
  %v28 = vld [vmem:[%s0 + $0x50] sm:$0xff]
  %v29 = vld [vmem:[%s0 + $0x58] sm:$0xff]
  %v30 = vld [vmem:[%s0 + $0x60] sm:$0xff]
  %v31 = vld [vmem:[%s0 + $0x68] sm:$0xff]
  %v32 = vld [vmem:[%s0 + $0x70] sm:$0xff]
  %v33 = vld [vmem:[%s0 + $0x78] sm:$0xff]
  %v34 = vld [vmem:[%s0 + $0x80] sm:$0xff]
  %v35 = vld [vmem:[%s0 + $0x88] sm:$0xff]
  %v36 = vld [vmem:[%s0 + $0x90] sm:$0xff]
  %v37 = vld [vmem:[%s0 + $0x98] sm:$0xff]
  %v38 = vld [vmem:[%s0 + $0xa0] sm:$0xff]
  %v39 = vld [vmem:[%s0 + $0xa8] sm:$0xff]
  %v40 = vld [vmem:[%s0 + $0xb0] sm:$0xff]
  %v41 = vld [vmem:[%s0 + $0xb8] sm:$0xff]
  %v42 = vld [vmem:[%s0 + $0xc0] sm:$0xff]
  %v43 = vld [vmem:[%s0 + $0xc8] sm:$0xff]
  %v44 = vld [vmem:[%s0 + $0xd0] sm:$0xff]
  %v45 = vld [vmem:[%s0 + $0xd8] sm:$0xff]
  %v46 = vld [vmem:[%s0 + $0xe0] sm:$0xff]
  %v47 = vld [vmem:[%s0 + $0xe8] sm:$0xff]
  %v48 = vld [vmem:[%s0 + $0xf0] sm:$0xff]
  %v49 = vld [vmem:[%s0 + $0xf8] sm:$0xff]
  %v50 = vld [vmem:[%s0 + $0x100] sm:$0xff]
  %v51 = vld [vmem:[%s0 + $0x108] sm:$0xff]
  %v52 = vld [vmem:[%s0 + $0x110] sm:$0xff]
  %v53 = vld [vmem:[%s0 + $0x118] sm:$0xff]
  %v54 = vld [vmem:[%s0 + $0x120] sm:$0xff]
  %v55 = vld [vmem:[%s0 + $0x128] sm:$0xff]
  %v56 = vld [vmem:[%s0 + $0x130] sm:$0xff]
  %v57 = vld [vmem:[%s0 + $0x138] sm:$0xff]
  %59 = vset.pattern.permute.xlu0 0
  %60 = vperm.xlu0 %59, %v18
  %v61 = vpop.permute.xlu0 %60
  %64 = vset.pattern.permute.xlu0 0
  %65 = vperm.xlu0 %64, %v19
  %v66 = vpop.permute.xlu0 %65
  %69 = vset.pattern.permute.xlu0 0
  %70 = vperm.xlu0 %69, %v20
  %v71 = vpop.permute.xlu0 %70
  %74 = vset.pattern.permute.xlu0 0
  %75 = vperm.xlu0 %74, %v21
  %v76 = vpop.permute.xlu0 %75
  %79 = vset.pattern.permute.xlu0 0
  %80 = vperm.xlu0 %79, %v22
  %v81 = vpop.permute.xlu0 %80
  %84 = vset.pattern.permute.xlu0 0
  %85 = vperm.xlu0 %84, %v23
  %v86 = vpop.permute.xlu0 %85
  %89 = vset.pattern.permute.xlu0 0
  %90 = vperm.xlu0 %89, %v24
  %v91 = vpop.permute.xlu0 %90
  %94 = vset.pattern.permute.xlu0 0
  %95 = vperm.xlu0 %94, %v25
  %v96 = vpop.permute.xlu0 %95
  %99 = vset.pattern.permute.xlu0 0
  %100 = vperm.xlu0 %99, %v26
  %v101 = vpop.permute.xlu0 %100
  %104 = vset.pattern.permute.xlu0 0
  %105 = vperm.xlu0 %104, %v27
  %v106 = vpop.permute.xlu0 %105
  %109 = vset.pattern.permute.xlu0 0
  %110 = vperm.xlu0 %109, %v28
  %v111 = vpop.permute.xlu0 %110
  %114 = vset.pattern.permute.xlu0 0
  %115 = vperm.xlu0 %114, %v29
  %v116 = vpop.permute.xlu0 %115
  %119 = vset.pattern.permute.xlu0 0
  %120 = vperm.xlu0 %119, %v30
  %v121 = vpop.permute.xlu0 %120
  %124 = vset.pattern.permute.xlu0 0
  %125 = vperm.xlu0 %124, %v31
  %v126 = vpop.permute.xlu0 %125
  %129 = vset.pattern.permute.xlu0 0
  %130 = vperm.xlu0 %129, %v32
  %v131 = vpop.permute.xlu0 %130
  %134 = vset.pattern.permute.xlu0 0
  %135 = vperm.xlu0 %134, %v33
  %v136 = vpop.permute.xlu0 %135
  %139 = vset.pattern.permute.xlu0 0
  %140 = vperm.xlu0 %139, %v34
  %v141 = vpop.permute.xlu0 %140
  %144 = vset.pattern.permute.xlu0 0
  %145 = vperm.xlu0 %144, %v35
  %v146 = vpop.permute.xlu0 %145
  %149 = vset.pattern.permute.xlu0 0
  %150 = vperm.xlu0 %149, %v36
  %v151 = vpop.permute.xlu0 %150
  %154 = vset.pattern.permute.xlu0 0
  %155 = vperm.xlu0 %154, %v37
  %v156 = vpop.permute.xlu0 %155
  %159 = vset.pattern.permute.xlu0 0
  %160 = vperm.xlu0 %159, %v38
  %v161 = vpop.permute.xlu0 %160
  %164 = vset.pattern.permute.xlu0 0
  %165 = vperm.xlu0 %164, %v39
  %v166 = vpop.permute.xlu0 %165
  %169 = vset.pattern.permute.xlu0 0
  %170 = vperm.xlu0 %169, %v40
  %v171 = vpop.permute.xlu0 %170
  %174 = vset.pattern.permute.xlu0 0
  %175 = vperm.xlu0 %174, %v41
  %v176 = vpop.permute.xlu0 %175
  %179 = vset.pattern.permute.xlu0 0
  %180 = vperm.xlu0 %179, %v42
  %v181 = vpop.permute.xlu0 %180
  %184 = vset.pattern.permute.xlu0 0
  %185 = vperm.xlu0 %184, %v43
  %v186 = vpop.permute.xlu0 %185
  %189 = vset.pattern.permute.xlu0 0
  %190 = vperm.xlu0 %189, %v44
  %v191 = vpop.permute.xlu0 %190
  %194 = vset.pattern.permute.xlu0 0
  %195 = vperm.xlu0 %194, %v45
  %v196 = vpop.permute.xlu0 %195
  %199 = vset.pattern.permute.xlu0 0
  %200 = vperm.xlu0 %199, %v46
  %v201 = vpop.permute.xlu0 %200
  %204 = vset.pattern.permute.xlu0 0
  %205 = vperm.xlu0 %204, %v47
  %v206 = vpop.permute.xlu0 %205
  %209 = vset.pattern.permute.xlu0 0
  %210 = vperm.xlu0 %209, %v48
  %v211 = vpop.permute.xlu0 %210
  %214 = vset.pattern.permute.xlu0 0
  %215 = vperm.xlu0 %214, %v49
  %v216 = vpop.permute.xlu0 %215
  %219 = vset.pattern.permute.xlu0 0
  %220 = vperm.xlu0 %219, %v50
  %v221 = vpop.permute.xlu0 %220
  %224 = vset.pattern.permute.xlu0 0
  %225 = vperm.xlu0 %224, %v51
  %v226 = vpop.permute.xlu0 %225
  %229 = vset.pattern.permute.xlu0 0
  %230 = vperm.xlu0 %229, %v52
  %v231 = vpop.permute.xlu0 %230
  %234 = vset.pattern.permute.xlu0 0
  %235 = vperm.xlu0 %234, %v53
  %v236 = vpop.permute.xlu0 %235
  %239 = vset.pattern.permute.xlu0 0
  %240 = vperm.xlu0 %239, %v54
  %v241 = vpop.permute.xlu0 %240
  %244 = vset.pattern.permute.xlu0 0
  %245 = vperm.xlu0 %244, %v55
  %v246 = vpop.permute.xlu0 %245
  %249 = vset.pattern.permute.xlu0 0
  %250 = vperm.xlu0 %249, %v56
  %v251 = vpop.permute.xlu0 %250
  %254 = vset.pattern.permute.xlu0 0
  %255 = vperm.xlu0 %254, %v57
  %v256 = vpop.permute.xlu0 %255
  %v258 = vperm.slane %v14, 0
  %v259 = vmul.f32 %v61, %v258
  %v260 = vmul.f32 %v66, %v258
  %v261 = vmul.f32 %v71, %v258
  %v262 = vmul.f32 %v76, %v258
  %v263 = vmul.f32 %v81, %v258
  %v264 = vmul.f32 %v86, %v258
  %v265 = vmul.f32 %v91, %v258
  %v266 = vmul.f32 %v96, %v258
  %v267 = vmul.f32 %v101, %v258
  %v268 = vmul.f32 %v106, %v258
  %v269 = vmul.f32 %v111, %v258
  %v270 = vmul.f32 %v116, %v258
  %v271 = vmul.f32 %v121, %v258
  %v272 = vmul.f32 %v126, %v258
  %v273 = vmul.f32 %v131, %v258
  %v274 = vmul.f32 %v136, %v258
  %v275 = vmul.f32 %v141, %v258
  %v276 = vmul.f32 %v146, %v258
  %v277 = vmul.f32 %v151, %v258
  %v278 = vmul.f32 %v156, %v258
  %v279 = vmul.f32 %v161, %v258
  %v280 = vmul.f32 %v166, %v258
  %v281 = vmul.f32 %v171, %v258
  %v282 = vmul.f32 %v176, %v258
  %v283 = vmul.f32 %v181, %v258
  %v284 = vmul.f32 %v186, %v258
  %v285 = vmul.f32 %v191, %v258
  %v286 = vmul.f32 %v196, %v258
  %v287 = vmul.f32 %v201, %v258
  %v288 = vmul.f32 %v206, %v258
  %v289 = vmul.f32 %v211, %v258
  %v290 = vmul.f32 %v216, %v258
  %v291 = vmul.f32 %v221, %v258
  %v292 = vmul.f32 %v226, %v258
  %v293 = vmul.f32 %v231, %v258
  %v294 = vmul.f32 %v236, %v258
  %v295 = vmul.f32 %v241, %v258
  %v296 = vmul.f32 %v246, %v258
  %v297 = vmul.f32 %v251, %v258
  %v298 = vmul.f32 %v256, %v258
  %v299 = vperm.slane %v15, 0
  %v300 = vadd.f32 %v259, %v299
  %v301 = vadd.f32 %v260, %v299
  %v302 = vadd.f32 %v261, %v299
  %v303 = vadd.f32 %v262, %v299
  %v304 = vadd.f32 %v263, %v299
  %v305 = vadd.f32 %v264, %v299
  %v306 = vadd.f32 %v265, %v299
  %v307 = vadd.f32 %v266, %v299
  %v308 = vadd.f32 %v267, %v299
  %v309 = vadd.f32 %v268, %v299
  %v310 = vadd.f32 %v269, %v299
  %v311 = vadd.f32 %v270, %v299
  %v312 = vadd.f32 %v271, %v299
  %v313 = vadd.f32 %v272, %v299
  %v314 = vadd.f32 %v273, %v299
  %v315 = vadd.f32 %v274, %v299
  %v316 = vadd.f32 %v275, %v299
  %v317 = vadd.f32 %v276, %v299
  %v318 = vadd.f32 %v277, %v299
  %v319 = vadd.f32 %v278, %v299
  %v320 = vadd.f32 %v279, %v299
  %v321 = vadd.f32 %v280, %v299
  %v322 = vadd.f32 %v281, %v299
  %v323 = vadd.f32 %v282, %v299
  %v324 = vadd.f32 %v283, %v299
  %v325 = vadd.f32 %v284, %v299
  %v326 = vadd.f32 %v285, %v299
  %v327 = vadd.f32 %v286, %v299
  %v328 = vadd.f32 %v287, %v299
  %v329 = vadd.f32 %v288, %v299
  %v330 = vadd.f32 %v289, %v299
  %v331 = vadd.f32 %v290, %v299
  %v332 = vadd.f32 %v291, %v299
  %v333 = vadd.f32 %v292, %v299
  %v334 = vadd.f32 %v293, %v299
  %v335 = vadd.f32 %v294, %v299
  %v336 = vadd.f32 %v295, %v299
  %v337 = vadd.f32 %v296, %v299
  %v338 = vadd.f32 %v297, %v299
  %v339 = vadd.f32 %v298, %v299
  %340 = vst [vmem:[#allocation2] sm:$0xff] %v300
  %341 = vst [vmem:[#allocation2 + $0x8] sm:$0xff] %v301
  %342 = vst [vmem:[#allocation2 + $0x10] sm:$0xff] %v302
  %343 = vst [vmem:[#allocation2 + $0x18] sm:$0xff] %v303
  %344 = vst [vmem:[#allocation2 + $0x20] sm:$0xff] %v304
  %345 = vst [vmem:[#allocation2 + $0x28] sm:$0xff] %v305
  %346 = vst [vmem:[#allocation2 + $0x30] sm:$0xff] %v306
  %347 = vst [vmem:[#allocation2 + $0x38] sm:$0xff] %v307
  %348 = vst [vmem:[#allocation2 + $0x40] sm:$0xff] %v308
  %349 = vst [vmem:[#allocation2 + $0x48] sm:$0xff] %v309
  %350 = vst [vmem:[#allocation2 + $0x50] sm:$0xff] %v310
  %351 = vst [vmem:[#allocation2 + $0x58] sm:$0xff] %v311
  %352 = vst [vmem:[#allocation2 + $0x60] sm:$0xff] %v312
  %353 = vst [vmem:[#allocation2 + $0x68] sm:$0xff] %v313
  %354 = vst [vmem:[#allocation2 + $0x70] sm:$0xff] %v314
  %355 = vst [vmem:[#allocation2 + $0x78] sm:$0xff] %v315
  %356 = vst [vmem:[#allocation2 + $0x80] sm:$0xff] %v316
  %357 = vst [vmem:[#allocation2 + $0x88] sm:$0xff] %v317
  %358 = vst [vmem:[#allocation2 + $0x90] sm:$0xff] %v318
  %359 = vst [vmem:[#allocation2 + $0x98] sm:$0xff] %v319
  %360 = vst [vmem:[#allocation2 + $0xa0] sm:$0xff] %v320
  %361 = vst [vmem:[#allocation2 + $0xa8] sm:$0xff] %v321
  %362 = vst [vmem:[#allocation2 + $0xb0] sm:$0xff] %v322
  %363 = vst [vmem:[#allocation2 + $0xb8] sm:$0xff] %v323
  %364 = vst [vmem:[#allocation2 + $0xc0] sm:$0xff] %v324
  %365 = vst [vmem:[#allocation2 + $0xc8] sm:$0xff] %v325
  %366 = vst [vmem:[#allocation2 + $0xd0] sm:$0xff] %v326
  %367 = vst [vmem:[#allocation2 + $0xd8] sm:$0xff] %v327
  %368 = vst [vmem:[#allocation2 + $0xe0] sm:$0xff] %v328
  %369 = vst [vmem:[#allocation2 + $0xe8] sm:$0xff] %v329
  %370 = vst [vmem:[#allocation2 + $0xf0] sm:$0xff] %v330
  %371 = vst [vmem:[#allocation2 + $0xf8] sm:$0xff] %v331
  %372 = vst [vmem:[#allocation2 + $0x100] sm:$0xff] %v332
  %373 = vst [vmem:[#allocation2 + $0x108] sm:$0xff] %v333
  %374 = vst [vmem:[#allocation2 + $0x110] sm:$0xff] %v334
  %375 = vst [vmem:[#allocation2 + $0x118] sm:$0xff] %v335
  %376 = vst [vmem:[#allocation2 + $0x120] sm:$0xff] %v336
  %377 = vst [vmem:[#allocation2 + $0x128] sm:$0xff] %v337
  %378 = vst [vmem:[#allocation2 + $0x130] sm:$0xff] %v338
  %379 = vst [vmem:[#allocation2 + $0x138] sm:$0xff] %v339
  %v380 = vld [vmem:[%s1] sm:$0xff]
  %v381 = vld [vmem:[%s1 + $0x8] sm:$0xff]
  %v382 = vld [vmem:[%s1 + $0x10] sm:$0xff]
  %v383 = vld [vmem:[%s1 + $0x18] sm:$0xff]
  %v384 = vld [vmem:[%s1 + $0x20] sm:$0xff]
  %v385 = vld [vmem:[%s1 + $0x28] sm:$0xff]
  %v386 = vld [vmem:[%s1 + $0x30] sm:$0xff]
  %v387 = vld [vmem:[%s1 + $0x38] sm:$0xff]
  %v388 = vld [vmem:[%s1 + $0x40] sm:$0xff]
  %v389 = vld [vmem:[%s1 + $0x48] sm:$0xff]
  %v390 = vld [vmem:[%s1 + $0x50] sm:$0xff]
  %v391 = vld [vmem:[%s1 + $0x58] sm:$0xff]
  %v392 = vld [vmem:[%s1 + $0x60] sm:$0xff]
  %v393 = vld [vmem:[%s1 + $0x68] sm:$0xff]
  %v394 = vld [vmem:[%s1 + $0x70] sm:$0xff]
  %v395 = vld [vmem:[%s1 + $0x78] sm:$0xff]
  %v396 = vld [vmem:[#allocation2] sm:$0xff]
  %397 = vmatpush.msra.mxu0 %v395
  %398 = vmatpush.msra.mxu0 %v394
  %399 = vmatpush.msra.mxu0 %v393
  %400 = vmatpush.msra.mxu0 %v392
  %401 = vmatpush.msra.mxu0 %v391
  %402 = vmatpush.msra.mxu0 %v390
  %403 = vmatpush.msra.mxu0 %v389
  %404 = vmatpush.msra.mxu0 %v388
  %405 = vmatpush.msra.mxu0 %v387
  %406 = vmatpush.msra.mxu0 %v386
  %407 = vmatpush.msra.mxu0 %v385
  %408 = vmatpush.msra.mxu0 %v384
  %409 = vmatpush.msra.mxu0 %v383
  %410 = vmatpush.msra.mxu0 %v382
  %411 = vmatpush.msra.mxu0 %v381
  %412 = vmatpush.msra.mxu0 %v380
  %413 = vmatmul.f32.gmra.mxu0 0.0
  %v414 = vpop.f32.mrf.mxu0
  %v415 = vadd.f32 %v396, %v414
  %416 = vdwg.mxu0
  %v417 = vtanh.pop %v415
  %s418 = scalar_lea.vmem [#allocation2], 8
  %v419 = vld [vmem:[%s418] sm:$0xff]
  %420 = vmatpush.msra.mxu0 %v395
  %421 = vmatpush.msra.mxu0 %v394
  %422 = vmatpush.msra.mxu0 %v393
  %423 = vmatpush.msra.mxu0 %v392
  %424 = vmatpush.msra.mxu0 %v391
  %425 = vmatpush.msra.mxu0 %v390
  %426 = vmatpush.msra.mxu0 %v389
  %427 = vmatpush.msra.mxu0 %v388
  %428 = vmatpush.msra.mxu0 %v387
  %429 = vmatpush.msra.mxu0 %v386
  %430 = vmatpush.msra.mxu0 %v385
  %431 = vmatpush.msra.mxu0 %v384
  %432 = vmatpush.msra.mxu0 %v383
  %433 = vmatpush.msra.mxu0 %v382
  %434 = vmatpush.msra.mxu0 %v381
  %435 = vmatpush.msra.mxu0 %v380
  %436 = vmatmul.f32.gmra.mxu0 %v417
  %v437 = vpop.f32.mrf.mxu0
  %v438 = vadd.f32 %v419, %v437
  %439 = vdwg.mxu0
  %v440 = vtanh.pop %v438
  %s441 = scalar_lea.vmem [#allocation2], 16
  %v442 = vld [vmem:[%s441] sm:$0xff]
  %443 = vmatpush.msra.mxu0 %v395
  %444 = vmatpush.msra.mxu0 %v394
  %445 = vmatpush.msra.mxu0 %v393
  %446 = vmatpush.msra.mxu0 %v392
  %447 = vmatpush.msra.mxu0 %v391
  %448 = vmatpush.msra.mxu0 %v390
  %449 = vmatpush.msra.mxu0 %v389
  %450 = vmatpush.msra.mxu0 %v388
  %451 = vmatpush.msra.mxu0 %v387
  %452 = vmatpush.msra.mxu0 %v386
  %453 = vmatpush.msra.mxu0 %v385
  %454 = vmatpush.msra.mxu0 %v384
  %455 = vmatpush.msra.mxu0 %v383
  %456 = vmatpush.msra.mxu0 %v382
  %457 = vmatpush.msra.mxu0 %v381
  %458 = vmatpush.msra.mxu0 %v380
  %459 = vmatmul.f32.gmra.mxu0 %v440
  %v460 = vpop.f32.mrf.mxu0
  %v461 = vadd.f32 %v442, %v460
  %462 = vdwg.mxu0
  %v463 = vtanh.pop %v461
  %s464 = scalar_lea.vmem [#allocation2], 24
  %v465 = vld [vmem:[%s464] sm:$0xff]
  %466 = vmatpush.msra.mxu0 %v395
  %467 = vmatpush.msra.mxu0 %v394
  %468 = vmatpush.msra.mxu0 %v393
  %469 = vmatpush.msra.mxu0 %v392
  %470 = vmatpush.msra.mxu0 %v391
  %471 = vmatpush.msra.mxu0 %v390
  %472 = vmatpush.msra.mxu0 %v389
  %473 = vmatpush.msra.mxu0 %v388
  %474 = vmatpush.msra.mxu0 %v387
  %475 = vmatpush.msra.mxu0 %v386
  %476 = vmatpush.msra.mxu0 %v385
  %477 = vmatpush.msra.mxu0 %v384
  %478 = vmatpush.msra.mxu0 %v383
  %479 = vmatpush.msra.mxu0 %v382
  %480 = vmatpush.msra.mxu0 %v381
  %481 = vmatpush.msra.mxu0 %v380
  %482 = vmatmul.f32.gmra.mxu0 %v463
  %v483 = vpop.f32.mrf.mxu0
  %v484 = vadd.f32 %v465, %v483
  %485 = vdwg.mxu0
  %v486 = vtanh.pop %v484
  %s487 = scalar_lea.vmem [#allocation2], 32
  %v488 = vld [vmem:[%s487] sm:$0xff]
  %489 = vmatpush.msra.mxu0 %v395
  %490 = vmatpush.msra.mxu0 %v394
  %491 = vmatpush.msra.mxu0 %v393
  %492 = vmatpush.msra.mxu0 %v392
  %493 = vmatpush.msra.mxu0 %v391
  %494 = vmatpush.msra.mxu0 %v390
  %495 = vmatpush.msra.mxu0 %v389
  %496 = vmatpush.msra.mxu0 %v388
  %497 = vmatpush.msra.mxu0 %v387
  %498 = vmatpush.msra.mxu0 %v386
  %499 = vmatpush.msra.mxu0 %v385
  %500 = vmatpush.msra.mxu0 %v384
  %501 = vmatpush.msra.mxu0 %v383
  %502 = vmatpush.msra.mxu0 %v382
  %503 = vmatpush.msra.mxu0 %v381
  %504 = vmatpush.msra.mxu0 %v380
  %505 = vmatmul.f32.gmra.mxu0 %v486
  %v506 = vpop.f32.mrf.mxu0
  %v507 = vadd.f32 %v488, %v506
  %508 = vdwg.mxu0
  %v509 = vtanh.pop %v507
  %s510 = scalar_lea.vmem [#allocation2], 40
  %v511 = vld [vmem:[%s510] sm:$0xff]
  %512 = vmatpush.msra.mxu0 %v395
  %513 = vmatpush.msra.mxu0 %v394
  %514 = vmatpush.msra.mxu0 %v393
  %515 = vmatpush.msra.mxu0 %v392
  %516 = vmatpush.msra.mxu0 %v391
  %517 = vmatpush.msra.mxu0 %v390
  %518 = vmatpush.msra.mxu0 %v389
  %519 = vmatpush.msra.mxu0 %v388
  %520 = vmatpush.msra.mxu0 %v387
  %521 = vmatpush.msra.mxu0 %v386
  %522 = vmatpush.msra.mxu0 %v385
  %523 = vmatpush.msra.mxu0 %v384
  %524 = vmatpush.msra.mxu0 %v383
  %525 = vmatpush.msra.mxu0 %v382
  %526 = vmatpush.msra.mxu0 %v381
  %527 = vmatpush.msra.mxu0 %v380
  %528 = vmatmul.f32.gmra.mxu0 %v509
  %v529 = vpop.f32.mrf.mxu0
  %v530 = vadd.f32 %v511, %v529
  %531 = vdwg.mxu0
  %v532 = vtanh.pop %v530
  %s533 = scalar_lea.vmem [#allocation2], 48
  %v534 = vld [vmem:[%s533] sm:$0xff]
  %535 = vmatpush.msra.mxu0 %v395
  %536 = vmatpush.msra.mxu0 %v394
  %537 = vmatpush.msra.mxu0 %v393
  %538 = vmatpush.msra.mxu0 %v392
  %539 = vmatpush.msra.mxu0 %v391
  %540 = vmatpush.msra.mxu0 %v390
  %541 = vmatpush.msra.mxu0 %v389
  %542 = vmatpush.msra.mxu0 %v388
  %543 = vmatpush.msra.mxu0 %v387
  %544 = vmatpush.msra.mxu0 %v386
  %545 = vmatpush.msra.mxu0 %v385
  %546 = vmatpush.msra.mxu0 %v384
  %547 = vmatpush.msra.mxu0 %v383
  %548 = vmatpush.msra.mxu0 %v382
  %549 = vmatpush.msra.mxu0 %v381
  %550 = vmatpush.msra.mxu0 %v380
  %551 = vmatmul.f32.gmra.mxu0 %v532
  %v552 = vpop.f32.mrf.mxu0
  %v553 = vadd.f32 %v534, %v552
  %554 = vdwg.mxu0
  %v555 = vtanh.pop %v553
  %s556 = scalar_lea.vmem [#allocation2], 56
  %v557 = vld [vmem:[%s556] sm:$0xff]
  %558 = vmatpush.msra.mxu0 %v395
  %559 = vmatpush.msra.mxu0 %v394
  %560 = vmatpush.msra.mxu0 %v393
  %561 = vmatpush.msra.mxu0 %v392
  %562 = vmatpush.msra.mxu0 %v391
  %563 = vmatpush.msra.mxu0 %v390
  %564 = vmatpush.msra.mxu0 %v389
  %565 = vmatpush.msra.mxu0 %v388
  %566 = vmatpush.msra.mxu0 %v387
  %567 = vmatpush.msra.mxu0 %v386
  %568 = vmatpush.msra.mxu0 %v385
  %569 = vmatpush.msra.mxu0 %v384
  %570 = vmatpush.msra.mxu0 %v383
  %571 = vmatpush.msra.mxu0 %v382
  %572 = vmatpush.msra.mxu0 %v381
  %573 = vmatpush.msra.mxu0 %v380
  %574 = vmatmul.f32.gmra.mxu0 %v555
  %v575 = vpop.f32.mrf.mxu0
  %v576 = vadd.f32 %v557, %v575
  %577 = vdwg.mxu0
  %v578 = vtanh.pop %v576
  %s579 = scalar_lea.vmem [#allocation2], 64
  %v580 = vld [vmem:[%s579] sm:$0xff]
  %581 = vmatpush.msra.mxu0 %v395
  %582 = vmatpush.msra.mxu0 %v394
  %583 = vmatpush.msra.mxu0 %v393
  %584 = vmatpush.msra.mxu0 %v392
  %585 = vmatpush.msra.mxu0 %v391
  %586 = vmatpush.msra.mxu0 %v390
  %587 = vmatpush.msra.mxu0 %v389
  %588 = vmatpush.msra.mxu0 %v388
  %589 = vmatpush.msra.mxu0 %v387
  %590 = vmatpush.msra.mxu0 %v386
  %591 = vmatpush.msra.mxu0 %v385
  %592 = vmatpush.msra.mxu0 %v384
  %593 = vmatpush.msra.mxu0 %v383
  %594 = vmatpush.msra.mxu0 %v382
  %595 = vmatpush.msra.mxu0 %v381
  %596 = vmatpush.msra.mxu0 %v380
  %597 = vmatmul.f32.gmra.mxu0 %v578
  %v598 = vpop.f32.mrf.mxu0
  %v599 = vadd.f32 %v580, %v598
  %600 = vdwg.mxu0
  %v601 = vtanh.pop %v599
  %s602 = scalar_lea.vmem [#allocation2], 72
  %v603 = vld [vmem:[%s602] sm:$0xff]
  %604 = vmatpush.msra.mxu0 %v395
  %605 = vmatpush.msra.mxu0 %v394
  %606 = vmatpush.msra.mxu0 %v393
  %607 = vmatpush.msra.mxu0 %v392
  %608 = vmatpush.msra.mxu0 %v391
  %609 = vmatpush.msra.mxu0 %v390
  %610 = vmatpush.msra.mxu0 %v389
  %611 = vmatpush.msra.mxu0 %v388
  %612 = vmatpush.msra.mxu0 %v387
  %613 = vmatpush.msra.mxu0 %v386
  %614 = vmatpush.msra.mxu0 %v385
  %615 = vmatpush.msra.mxu0 %v384
  %616 = vmatpush.msra.mxu0 %v383
  %617 = vmatpush.msra.mxu0 %v382
  %618 = vmatpush.msra.mxu0 %v381
  %619 = vmatpush.msra.mxu0 %v380
  %620 = vmatmul.f32.gmra.mxu0 %v601
  %v621 = vpop.f32.mrf.mxu0
  %v622 = vadd.f32 %v603, %v621
  %623 = vdwg.mxu0
  %v624 = vtanh.pop %v622
  %s625 = scalar_lea.vmem [#allocation2], 80
  %v626 = vld [vmem:[%s625] sm:$0xff]
  %627 = vmatpush.msra.mxu0 %v395
  %628 = vmatpush.msra.mxu0 %v394
  %629 = vmatpush.msra.mxu0 %v393
  %630 = vmatpush.msra.mxu0 %v392
  %631 = vmatpush.msra.mxu0 %v391
  %632 = vmatpush.msra.mxu0 %v390
  %633 = vmatpush.msra.mxu0 %v389
  %634 = vmatpush.msra.mxu0 %v388
  %635 = vmatpush.msra.mxu0 %v387
  %636 = vmatpush.msra.mxu0 %v386
  %637 = vmatpush.msra.mxu0 %v385
  %638 = vmatpush.msra.mxu0 %v384
  %639 = vmatpush.msra.mxu0 %v383
  %640 = vmatpush.msra.mxu0 %v382
  %641 = vmatpush.msra.mxu0 %v381
  %642 = vmatpush.msra.mxu0 %v380
  %643 = vmatmul.f32.gmra.mxu0 %v624
  %v644 = vpop.f32.mrf.mxu0
  %v645 = vadd.f32 %v626, %v644
  %646 = vdwg.mxu0
  %v647 = vtanh.pop %v645
  %s648 = scalar_lea.vmem [#allocation2], 88
  %v649 = vld [vmem:[%s648] sm:$0xff]
  %650 = vmatpush.msra.mxu0 %v395
  %651 = vmatpush.msra.mxu0 %v394
  %652 = vmatpush.msra.mxu0 %v393
  %653 = vmatpush.msra.mxu0 %v392
  %654 = vmatpush.msra.mxu0 %v391
  %655 = vmatpush.msra.mxu0 %v390
  %656 = vmatpush.msra.mxu0 %v389
  %657 = vmatpush.msra.mxu0 %v388
  %658 = vmatpush.msra.mxu0 %v387
  %659 = vmatpush.msra.mxu0 %v386
  %660 = vmatpush.msra.mxu0 %v385
  %661 = vmatpush.msra.mxu0 %v384
  %662 = vmatpush.msra.mxu0 %v383
  %663 = vmatpush.msra.mxu0 %v382
  %664 = vmatpush.msra.mxu0 %v381
  %665 = vmatpush.msra.mxu0 %v380
  %666 = vmatmul.f32.gmra.mxu0 %v647
  %v667 = vpop.f32.mrf.mxu0
  %v668 = vadd.f32 %v649, %v667
  %669 = vdwg.mxu0
  %v670 = vtanh.pop %v668
  %s671 = scalar_lea.vmem [#allocation2], 96
  %v672 = vld [vmem:[%s671] sm:$0xff]
  %673 = vmatpush.msra.mxu0 %v395
  %674 = vmatpush.msra.mxu0 %v394
  %675 = vmatpush.msra.mxu0 %v393
  %676 = vmatpush.msra.mxu0 %v392
  %677 = vmatpush.msra.mxu0 %v391
  %678 = vmatpush.msra.mxu0 %v390
  %679 = vmatpush.msra.mxu0 %v389
  %680 = vmatpush.msra.mxu0 %v388
  %681 = vmatpush.msra.mxu0 %v387
  %682 = vmatpush.msra.mxu0 %v386
  %683 = vmatpush.msra.mxu0 %v385
  %684 = vmatpush.msra.mxu0 %v384
  %685 = vmatpush.msra.mxu0 %v383
  %686 = vmatpush.msra.mxu0 %v382
  %687 = vmatpush.msra.mxu0 %v381
  %688 = vmatpush.msra.mxu0 %v380
  %689 = vmatmul.f32.gmra.mxu0 %v670
  %v690 = vpop.f32.mrf.mxu0
  %v691 = vadd.f32 %v672, %v690
  %692 = vdwg.mxu0
  %v693 = vtanh.pop %v691
  %s694 = scalar_lea.vmem [#allocation2], 104
  %v695 = vld [vmem:[%s694] sm:$0xff]
  %696 = vmatpush.msra.mxu0 %v395
  %697 = vmatpush.msra.mxu0 %v394
  %698 = vmatpush.msra.mxu0 %v393
  %699 = vmatpush.msra.mxu0 %v392
  %700 = vmatpush.msra.mxu0 %v391
  %701 = vmatpush.msra.mxu0 %v390
  %702 = vmatpush.msra.mxu0 %v389
  %703 = vmatpush.msra.mxu0 %v388
  %704 = vmatpush.msra.mxu0 %v387
  %705 = vmatpush.msra.mxu0 %v386
  %706 = vmatpush.msra.mxu0 %v385
  %707 = vmatpush.msra.mxu0 %v384
  %708 = vmatpush.msra.mxu0 %v383
  %709 = vmatpush.msra.mxu0 %v382
  %710 = vmatpush.msra.mxu0 %v381
  %711 = vmatpush.msra.mxu0 %v380
  %712 = vmatmul.f32.gmra.mxu0 %v693
  %v713 = vpop.f32.mrf.mxu0
  %v714 = vadd.f32 %v695, %v713
  %715 = vdwg.mxu0
  %v716 = vtanh.pop %v714
  %s717 = scalar_lea.vmem [#allocation2], 112
  %v718 = vld [vmem:[%s717] sm:$0xff]
  %719 = vmatpush.msra.mxu0 %v395
  %720 = vmatpush.msra.mxu0 %v394
  %721 = vmatpush.msra.mxu0 %v393
  %722 = vmatpush.msra.mxu0 %v392
  %723 = vmatpush.msra.mxu0 %v391
  %724 = vmatpush.msra.mxu0 %v390
  %725 = vmatpush.msra.mxu0 %v389
  %726 = vmatpush.msra.mxu0 %v388
  %727 = vmatpush.msra.mxu0 %v387
  %728 = vmatpush.msra.mxu0 %v386
  %729 = vmatpush.msra.mxu0 %v385
  %730 = vmatpush.msra.mxu0 %v384
  %731 = vmatpush.msra.mxu0 %v383
  %732 = vmatpush.msra.mxu0 %v382
  %733 = vmatpush.msra.mxu0 %v381
  %734 = vmatpush.msra.mxu0 %v380
  %735 = vmatmul.f32.gmra.mxu0 %v716
  %v736 = vpop.f32.mrf.mxu0
  %v737 = vadd.f32 %v718, %v736
  %738 = vdwg.mxu0
  %v739 = vtanh.pop %v737
  %s740 = scalar_lea.vmem [#allocation2], 120
  %v741 = vld [vmem:[%s740] sm:$0xff]
  %742 = vmatpush.msra.mxu0 %v395
  %743 = vmatpush.msra.mxu0 %v394
  %744 = vmatpush.msra.mxu0 %v393
  %745 = vmatpush.msra.mxu0 %v392
  %746 = vmatpush.msra.mxu0 %v391
  %747 = vmatpush.msra.mxu0 %v390
  %748 = vmatpush.msra.mxu0 %v389
  %749 = vmatpush.msra.mxu0 %v388
  %750 = vmatpush.msra.mxu0 %v387
  %751 = vmatpush.msra.mxu0 %v386
  %752 = vmatpush.msra.mxu0 %v385
  %753 = vmatpush.msra.mxu0 %v384
  %754 = vmatpush.msra.mxu0 %v383
  %755 = vmatpush.msra.mxu0 %v382
  %756 = vmatpush.msra.mxu0 %v381
  %757 = vmatpush.msra.mxu0 %v380
  %758 = vmatmul.f32.gmra.mxu0 %v739
  %v759 = vpop.f32.mrf.mxu0
  %v760 = vadd.f32 %v741, %v759
  %761 = vdwg.mxu0
  %v762 = vtanh.pop %v760
  %s763 = scalar_lea.vmem [#allocation2], 128
  %v764 = vld [vmem:[%s763] sm:$0xff]
  %765 = vmatpush.msra.mxu0 %v395
  %766 = vmatpush.msra.mxu0 %v394
  %767 = vmatpush.msra.mxu0 %v393
  %768 = vmatpush.msra.mxu0 %v392
  %769 = vmatpush.msra.mxu0 %v391
  %770 = vmatpush.msra.mxu0 %v390
  %771 = vmatpush.msra.mxu0 %v389
  %772 = vmatpush.msra.mxu0 %v388
  %773 = vmatpush.msra.mxu0 %v387
  %774 = vmatpush.msra.mxu0 %v386
  %775 = vmatpush.msra.mxu0 %v385
  %776 = vmatpush.msra.mxu0 %v384
  %777 = vmatpush.msra.mxu0 %v383
  %778 = vmatpush.msra.mxu0 %v382
  %779 = vmatpush.msra.mxu0 %v381
  %780 = vmatpush.msra.mxu0 %v380
  %781 = vmatmul.f32.gmra.mxu0 %v762
  %v782 = vpop.f32.mrf.mxu0
  %v783 = vadd.f32 %v764, %v782
  %784 = vdwg.mxu0
  %v785 = vtanh.pop %v783
  %s786 = scalar_lea.vmem [#allocation2], 136
  %v787 = vld [vmem:[%s786] sm:$0xff]
  %788 = vmatpush.msra.mxu0 %v395
  %789 = vmatpush.msra.mxu0 %v394
  %790 = vmatpush.msra.mxu0 %v393
  %791 = vmatpush.msra.mxu0 %v392
  %792 = vmatpush.msra.mxu0 %v391
  %793 = vmatpush.msra.mxu0 %v390
  %794 = vmatpush.msra.mxu0 %v389
  %795 = vmatpush.msra.mxu0 %v388
  %796 = vmatpush.msra.mxu0 %v387
  %797 = vmatpush.msra.mxu0 %v386
  %798 = vmatpush.msra.mxu0 %v385
  %799 = vmatpush.msra.mxu0 %v384
  %800 = vmatpush.msra.mxu0 %v383
  %801 = vmatpush.msra.mxu0 %v382
  %802 = vmatpush.msra.mxu0 %v381
  %803 = vmatpush.msra.mxu0 %v380
  %804 = vmatmul.f32.gmra.mxu0 %v785
  %v805 = vpop.f32.mrf.mxu0
  %v806 = vadd.f32 %v787, %v805
  %807 = vdwg.mxu0
  %v808 = vtanh.pop %v806
  %s809 = scalar_lea.vmem [#allocation2], 144
  %v810 = vld [vmem:[%s809] sm:$0xff]
  %811 = vmatpush.msra.mxu0 %v395
  %812 = vmatpush.msra.mxu0 %v394
  %813 = vmatpush.msra.mxu0 %v393
  %814 = vmatpush.msra.mxu0 %v392
  %815 = vmatpush.msra.mxu0 %v391
  %816 = vmatpush.msra.mxu0 %v390
  %817 = vmatpush.msra.mxu0 %v389
  %818 = vmatpush.msra.mxu0 %v388
  %819 = vmatpush.msra.mxu0 %v387
  %820 = vmatpush.msra.mxu0 %v386
  %821 = vmatpush.msra.mxu0 %v385
  %822 = vmatpush.msra.mxu0 %v384
  %823 = vmatpush.msra.mxu0 %v383
  %824 = vmatpush.msra.mxu0 %v382
  %825 = vmatpush.msra.mxu0 %v381
  %826 = vmatpush.msra.mxu0 %v380
  %827 = vmatmul.f32.gmra.mxu0 %v808
  %v828 = vpop.f32.mrf.mxu0
  %v829 = vadd.f32 %v810, %v828
  %830 = vdwg.mxu0
  %v831 = vtanh.pop %v829
  %s832 = scalar_lea.vmem [#allocation2], 152
  %v833 = vld [vmem:[%s832] sm:$0xff]
  %834 = vmatpush.msra.mxu0 %v395
  %835 = vmatpush.msra.mxu0 %v394
  %836 = vmatpush.msra.mxu0 %v393
  %837 = vmatpush.msra.mxu0 %v392
  %838 = vmatpush.msra.mxu0 %v391
  %839 = vmatpush.msra.mxu0 %v390
  %840 = vmatpush.msra.mxu0 %v389
  %841 = vmatpush.msra.mxu0 %v388
  %842 = vmatpush.msra.mxu0 %v387
  %843 = vmatpush.msra.mxu0 %v386
  %844 = vmatpush.msra.mxu0 %v385
  %845 = vmatpush.msra.mxu0 %v384
  %846 = vmatpush.msra.mxu0 %v383
  %847 = vmatpush.msra.mxu0 %v382
  %848 = vmatpush.msra.mxu0 %v381
  %849 = vmatpush.msra.mxu0 %v380
  %850 = vmatmul.f32.gmra.mxu0 %v831
  %v851 = vpop.f32.mrf.mxu0
  %v852 = vadd.f32 %v833, %v851
  %853 = vdwg.mxu0
  %v854 = vtanh.pop %v852
  %s855 = scalar_lea.vmem [#allocation2], 160
  %v856 = vld [vmem:[%s855] sm:$0xff]
  %857 = vmatpush.msra.mxu0 %v395
  %858 = vmatpush.msra.mxu0 %v394
  %859 = vmatpush.msra.mxu0 %v393
  %860 = vmatpush.msra.mxu0 %v392
  %861 = vmatpush.msra.mxu0 %v391
  %862 = vmatpush.msra.mxu0 %v390
  %863 = vmatpush.msra.mxu0 %v389
  %864 = vmatpush.msra.mxu0 %v388
  %865 = vmatpush.msra.mxu0 %v387
  %866 = vmatpush.msra.mxu0 %v386
  %867 = vmatpush.msra.mxu0 %v385
  %868 = vmatpush.msra.mxu0 %v384
  %869 = vmatpush.msra.mxu0 %v383
  %870 = vmatpush.msra.mxu0 %v382
  %871 = vmatpush.msra.mxu0 %v381
  %872 = vmatpush.msra.mxu0 %v380
  %873 = vmatmul.f32.gmra.mxu0 %v854
  %v874 = vpop.f32.mrf.mxu0
  %v875 = vadd.f32 %v856, %v874
  %876 = vdwg.mxu0
  %v877 = vtanh.pop %v875
  %s878 = scalar_lea.vmem [#allocation2], 168
  %v879 = vld [vmem:[%s878] sm:$0xff]
  %880 = vmatpush.msra.mxu0 %v395
  %881 = vmatpush.msra.mxu0 %v394
  %882 = vmatpush.msra.mxu0 %v393
  %883 = vmatpush.msra.mxu0 %v392
  %884 = vmatpush.msra.mxu0 %v391
  %885 = vmatpush.msra.mxu0 %v390
  %886 = vmatpush.msra.mxu0 %v389
  %887 = vmatpush.msra.mxu0 %v388
  %888 = vmatpush.msra.mxu0 %v387
  %889 = vmatpush.msra.mxu0 %v386
  %890 = vmatpush.msra.mxu0 %v385
  %891 = vmatpush.msra.mxu0 %v384
  %892 = vmatpush.msra.mxu0 %v383
  %893 = vmatpush.msra.mxu0 %v382
  %894 = vmatpush.msra.mxu0 %v381
  %895 = vmatpush.msra.mxu0 %v380
  %896 = vmatmul.f32.gmra.mxu0 %v877
  %v897 = vpop.f32.mrf.mxu0
  %v898 = vadd.f32 %v879, %v897
  %899 = vdwg.mxu0
  %v900 = vtanh.pop %v898
  %s901 = scalar_lea.vmem [#allocation2], 176
  %v902 = vld [vmem:[%s901] sm:$0xff]
  %903 = vmatpush.msra.mxu0 %v395
  %904 = vmatpush.msra.mxu0 %v394
  %905 = vmatpush.msra.mxu0 %v393
  %906 = vmatpush.msra.mxu0 %v392
  %907 = vmatpush.msra.mxu0 %v391
  %908 = vmatpush.msra.mxu0 %v390
  %909 = vmatpush.msra.mxu0 %v389
  %910 = vmatpush.msra.mxu0 %v388
  %911 = vmatpush.msra.mxu0 %v387
  %912 = vmatpush.msra.mxu0 %v386
  %913 = vmatpush.msra.mxu0 %v385
  %914 = vmatpush.msra.mxu0 %v384
  %915 = vmatpush.msra.mxu0 %v383
  %916 = vmatpush.msra.mxu0 %v382
  %917 = vmatpush.msra.mxu0 %v381
  %918 = vmatpush.msra.mxu0 %v380
  %919 = vmatmul.f32.gmra.mxu0 %v900
  %v920 = vpop.f32.mrf.mxu0
  %v921 = vadd.f32 %v902, %v920
  %922 = vdwg.mxu0
  %v923 = vtanh.pop %v921
  %s924 = scalar_lea.vmem [#allocation2], 184
  %v925 = vld [vmem:[%s924] sm:$0xff]
  %926 = vmatpush.msra.mxu0 %v395
  %927 = vmatpush.msra.mxu0 %v394
  %928 = vmatpush.msra.mxu0 %v393
  %929 = vmatpush.msra.mxu0 %v392
  %930 = vmatpush.msra.mxu0 %v391
  %931 = vmatpush.msra.mxu0 %v390
  %932 = vmatpush.msra.mxu0 %v389
  %933 = vmatpush.msra.mxu0 %v388
  %934 = vmatpush.msra.mxu0 %v387
  %935 = vmatpush.msra.mxu0 %v386
  %936 = vmatpush.msra.mxu0 %v385
  %937 = vmatpush.msra.mxu0 %v384
  %938 = vmatpush.msra.mxu0 %v383
  %939 = vmatpush.msra.mxu0 %v382
  %940 = vmatpush.msra.mxu0 %v381
  %941 = vmatpush.msra.mxu0 %v380
  %942 = vmatmul.f32.gmra.mxu0 %v923
  %v943 = vpop.f32.mrf.mxu0
  %v944 = vadd.f32 %v925, %v943
  %945 = vdwg.mxu0
  %v946 = vtanh.pop %v944
  %s947 = scalar_lea.vmem [#allocation2], 192
  %v948 = vld [vmem:[%s947] sm:$0xff]
  %949 = vmatpush.msra.mxu0 %v395
  %950 = vmatpush.msra.mxu0 %v394
  %951 = vmatpush.msra.mxu0 %v393
  %952 = vmatpush.msra.mxu0 %v392
  %953 = vmatpush.msra.mxu0 %v391
  %954 = vmatpush.msra.mxu0 %v390
  %955 = vmatpush.msra.mxu0 %v389
  %956 = vmatpush.msra.mxu0 %v388
  %957 = vmatpush.msra.mxu0 %v387
  %958 = vmatpush.msra.mxu0 %v386
  %959 = vmatpush.msra.mxu0 %v385
  %960 = vmatpush.msra.mxu0 %v384
  %961 = vmatpush.msra.mxu0 %v383
  %962 = vmatpush.msra.mxu0 %v382
  %963 = vmatpush.msra.mxu0 %v381
  %964 = vmatpush.msra.mxu0 %v380
  %965 = vmatmul.f32.gmra.mxu0 %v946
  %v966 = vpop.f32.mrf.mxu0
  %v967 = vadd.f32 %v948, %v966
  %968 = vdwg.mxu0
  %v969 = vtanh.pop %v967
  %s970 = scalar_lea.vmem [#allocation2], 200
  %v971 = vld [vmem:[%s970] sm:$0xff]
  %972 = vmatpush.msra.mxu0 %v395
  %973 = vmatpush.msra.mxu0 %v394
  %974 = vmatpush.msra.mxu0 %v393
  %975 = vmatpush.msra.mxu0 %v392
  %976 = vmatpush.msra.mxu0 %v391
  %977 = vmatpush.msra.mxu0 %v390
  %978 = vmatpush.msra.mxu0 %v389
  %979 = vmatpush.msra.mxu0 %v388
  %980 = vmatpush.msra.mxu0 %v387
  %981 = vmatpush.msra.mxu0 %v386
  %982 = vmatpush.msra.mxu0 %v385
  %983 = vmatpush.msra.mxu0 %v384
  %984 = vmatpush.msra.mxu0 %v383
  %985 = vmatpush.msra.mxu0 %v382
  %986 = vmatpush.msra.mxu0 %v381
  %987 = vmatpush.msra.mxu0 %v380
  %988 = vmatmul.f32.gmra.mxu0 %v969
  %v989 = vpop.f32.mrf.mxu0
  %v990 = vadd.f32 %v971, %v989
  %991 = vdwg.mxu0
  %v992 = vtanh.pop %v990
  %s993 = scalar_lea.vmem [#allocation2], 208
  %v994 = vld [vmem:[%s993] sm:$0xff]
  %995 = vmatpush.msra.mxu0 %v395
  %996 = vmatpush.msra.mxu0 %v394
  %997 = vmatpush.msra.mxu0 %v393
  %998 = vmatpush.msra.mxu0 %v392
  %999 = vmatpush.msra.mxu0 %v391
  %1000 = vmatpush.msra.mxu0 %v390
  %1001 = vmatpush.msra.mxu0 %v389
  %1002 = vmatpush.msra.mxu0 %v388
  %1003 = vmatpush.msra.mxu0 %v387
  %1004 = vmatpush.msra.mxu0 %v386
  %1005 = vmatpush.msra.mxu0 %v385
  %1006 = vmatpush.msra.mxu0 %v384
  %1007 = vmatpush.msra.mxu0 %v383
  %1008 = vmatpush.msra.mxu0 %v382
  %1009 = vmatpush.msra.mxu0 %v381
  %1010 = vmatpush.msra.mxu0 %v380
  %1011 = vmatmul.f32.gmra.mxu0 %v992
  %v1012 = vpop.f32.mrf.mxu0
  %v1013 = vadd.f32 %v994, %v1012
  %1014 = vdwg.mxu0
  %v1015 = vtanh.pop %v1013
  %s1016 = scalar_lea.vmem [#allocation2], 216
  %v1017 = vld [vmem:[%s1016] sm:$0xff]
  %1018 = vmatpush.msra.mxu0 %v395
  %1019 = vmatpush.msra.mxu0 %v394
  %1020 = vmatpush.msra.mxu0 %v393
  %1021 = vmatpush.msra.mxu0 %v392
  %1022 = vmatpush.msra.mxu0 %v391
  %1023 = vmatpush.msra.mxu0 %v390
  %1024 = vmatpush.msra.mxu0 %v389
  %1025 = vmatpush.msra.mxu0 %v388
  %1026 = vmatpush.msra.mxu0 %v387
  %1027 = vmatpush.msra.mxu0 %v386
  %1028 = vmatpush.msra.mxu0 %v385
  %1029 = vmatpush.msra.mxu0 %v384
  %1030 = vmatpush.msra.mxu0 %v383
  %1031 = vmatpush.msra.mxu0 %v382
  %1032 = vmatpush.msra.mxu0 %v381
  %1033 = vmatpush.msra.mxu0 %v380
  %1034 = vmatmul.f32.gmra.mxu0 %v1015
  %v1035 = vpop.f32.mrf.mxu0
  %v1036 = vadd.f32 %v1017, %v1035
  %1037 = vdwg.mxu0
  %v1038 = vtanh.pop %v1036
  %s1039 = scalar_lea.vmem [#allocation2], 224
  %v1040 = vld [vmem:[%s1039] sm:$0xff]
  %1041 = vmatpush.msra.mxu0 %v395
  %1042 = vmatpush.msra.mxu0 %v394
  %1043 = vmatpush.msra.mxu0 %v393
  %1044 = vmatpush.msra.mxu0 %v392
  %1045 = vmatpush.msra.mxu0 %v391
  %1046 = vmatpush.msra.mxu0 %v390
  %1047 = vmatpush.msra.mxu0 %v389
  %1048 = vmatpush.msra.mxu0 %v388
  %1049 = vmatpush.msra.mxu0 %v387
  %1050 = vmatpush.msra.mxu0 %v386
  %1051 = vmatpush.msra.mxu0 %v385
  %1052 = vmatpush.msra.mxu0 %v384
  %1053 = vmatpush.msra.mxu0 %v383
  %1054 = vmatpush.msra.mxu0 %v382
  %1055 = vmatpush.msra.mxu0 %v381
  %1056 = vmatpush.msra.mxu0 %v380
  %1057 = vmatmul.f32.gmra.mxu0 %v1038
  %v1058 = vpop.f32.mrf.mxu0
  %v1059 = vadd.f32 %v1040, %v1058
  %1060 = vdwg.mxu0
  %v1061 = vtanh.pop %v1059
  %s1062 = scalar_lea.vmem [#allocation2], 232
  %v1063 = vld [vmem:[%s1062] sm:$0xff]
  %1064 = vmatpush.msra.mxu0 %v395
  %1065 = vmatpush.msra.mxu0 %v394
  %1066 = vmatpush.msra.mxu0 %v393
  %1067 = vmatpush.msra.mxu0 %v392
  %1068 = vmatpush.msra.mxu0 %v391
  %1069 = vmatpush.msra.mxu0 %v390
  %1070 = vmatpush.msra.mxu0 %v389
  %1071 = vmatpush.msra.mxu0 %v388
  %1072 = vmatpush.msra.mxu0 %v387
  %1073 = vmatpush.msra.mxu0 %v386
  %1074 = vmatpush.msra.mxu0 %v385
  %1075 = vmatpush.msra.mxu0 %v384
  %1076 = vmatpush.msra.mxu0 %v383
  %1077 = vmatpush.msra.mxu0 %v382
  %1078 = vmatpush.msra.mxu0 %v381
  %1079 = vmatpush.msra.mxu0 %v380
  %1080 = vmatmul.f32.gmra.mxu0 %v1061
  %v1081 = vpop.f32.mrf.mxu0
  %v1082 = vadd.f32 %v1063, %v1081
  %1083 = vdwg.mxu0
  %v1084 = vtanh.pop %v1082
  %s1085 = scalar_lea.vmem [#allocation2], 240
  %v1086 = vld [vmem:[%s1085] sm:$0xff]
  %1087 = vmatpush.msra.mxu0 %v395
  %1088 = vmatpush.msra.mxu0 %v394
  %1089 = vmatpush.msra.mxu0 %v393
  %1090 = vmatpush.msra.mxu0 %v392
  %1091 = vmatpush.msra.mxu0 %v391
  %1092 = vmatpush.msra.mxu0 %v390
  %1093 = vmatpush.msra.mxu0 %v389
  %1094 = vmatpush.msra.mxu0 %v388
  %1095 = vmatpush.msra.mxu0 %v387
  %1096 = vmatpush.msra.mxu0 %v386
  %1097 = vmatpush.msra.mxu0 %v385
  %1098 = vmatpush.msra.mxu0 %v384
  %1099 = vmatpush.msra.mxu0 %v383
  %1100 = vmatpush.msra.mxu0 %v382
  %1101 = vmatpush.msra.mxu0 %v381
  %1102 = vmatpush.msra.mxu0 %v380
  %1103 = vmatmul.f32.gmra.mxu0 %v1084
  %v1104 = vpop.f32.mrf.mxu0
  %v1105 = vadd.f32 %v1086, %v1104
  %1106 = vdwg.mxu0
  %v1107 = vtanh.pop %v1105
  %s1108 = scalar_lea.vmem [#allocation2], 248
  %v1109 = vld [vmem:[%s1108] sm:$0xff]
  %1110 = vmatpush.msra.mxu0 %v395
  %1111 = vmatpush.msra.mxu0 %v394
  %1112 = vmatpush.msra.mxu0 %v393
  %1113 = vmatpush.msra.mxu0 %v392
  %1114 = vmatpush.msra.mxu0 %v391
  %1115 = vmatpush.msra.mxu0 %v390
  %1116 = vmatpush.msra.mxu0 %v389
  %1117 = vmatpush.msra.mxu0 %v388
  %1118 = vmatpush.msra.mxu0 %v387
  %1119 = vmatpush.msra.mxu0 %v386
  %1120 = vmatpush.msra.mxu0 %v385
  %1121 = vmatpush.msra.mxu0 %v384
  %1122 = vmatpush.msra.mxu0 %v383
  %1123 = vmatpush.msra.mxu0 %v382
  %1124 = vmatpush.msra.mxu0 %v381
  %1125 = vmatpush.msra.mxu0 %v380
  %1126 = vmatmul.f32.gmra.mxu0 %v1107
  %v1127 = vpop.f32.mrf.mxu0
  %v1128 = vadd.f32 %v1109, %v1127
  %1129 = vdwg.mxu0
  %v1130 = vtanh.pop %v1128
  %s1131 = scalar_lea.vmem [#allocation2], 256
  %v1132 = vld [vmem:[%s1131] sm:$0xff]
  %1133 = vmatpush.msra.mxu0 %v395
  %1134 = vmatpush.msra.mxu0 %v394
  %1135 = vmatpush.msra.mxu0 %v393
  %1136 = vmatpush.msra.mxu0 %v392
  %1137 = vmatpush.msra.mxu0 %v391
  %1138 = vmatpush.msra.mxu0 %v390
  %1139 = vmatpush.msra.mxu0 %v389
  %1140 = vmatpush.msra.mxu0 %v388
  %1141 = vmatpush.msra.mxu0 %v387
  %1142 = vmatpush.msra.mxu0 %v386
  %1143 = vmatpush.msra.mxu0 %v385
  %1144 = vmatpush.msra.mxu0 %v384
  %1145 = vmatpush.msra.mxu0 %v383
  %1146 = vmatpush.msra.mxu0 %v382
  %1147 = vmatpush.msra.mxu0 %v381
  %1148 = vmatpush.msra.mxu0 %v380
  %1149 = vmatmul.f32.gmra.mxu0 %v1130
  %v1150 = vpop.f32.mrf.mxu0
  %v1151 = vadd.f32 %v1132, %v1150
  %1152 = vdwg.mxu0
  %v1153 = vtanh.pop %v1151
  %s1154 = scalar_lea.vmem [#allocation2], 264
  %v1155 = vld [vmem:[%s1154] sm:$0xff]
  %1156 = vmatpush.msra.mxu0 %v395
  %1157 = vmatpush.msra.mxu0 %v394
  %1158 = vmatpush.msra.mxu0 %v393
  %1159 = vmatpush.msra.mxu0 %v392
  %1160 = vmatpush.msra.mxu0 %v391
  %1161 = vmatpush.msra.mxu0 %v390
  %1162 = vmatpush.msra.mxu0 %v389
  %1163 = vmatpush.msra.mxu0 %v388
  %1164 = vmatpush.msra.mxu0 %v387
  %1165 = vmatpush.msra.mxu0 %v386
  %1166 = vmatpush.msra.mxu0 %v385
  %1167 = vmatpush.msra.mxu0 %v384
  %1168 = vmatpush.msra.mxu0 %v383
  %1169 = vmatpush.msra.mxu0 %v382
  %1170 = vmatpush.msra.mxu0 %v381
  %1171 = vmatpush.msra.mxu0 %v380
  %1172 = vmatmul.f32.gmra.mxu0 %v1153
  %v1173 = vpop.f32.mrf.mxu0
  %v1174 = vadd.f32 %v1155, %v1173
  %1175 = vdwg.mxu0
  %v1176 = vtanh.pop %v1174
  %s1177 = scalar_lea.vmem [#allocation2], 272
  %v1178 = vld [vmem:[%s1177] sm:$0xff]
  %1179 = vmatpush.msra.mxu0 %v395
  %1180 = vmatpush.msra.mxu0 %v394
  %1181 = vmatpush.msra.mxu0 %v393
  %1182 = vmatpush.msra.mxu0 %v392
  %1183 = vmatpush.msra.mxu0 %v391
  %1184 = vmatpush.msra.mxu0 %v390
  %1185 = vmatpush.msra.mxu0 %v389
  %1186 = vmatpush.msra.mxu0 %v388
  %1187 = vmatpush.msra.mxu0 %v387
  %1188 = vmatpush.msra.mxu0 %v386
  %1189 = vmatpush.msra.mxu0 %v385
  %1190 = vmatpush.msra.mxu0 %v384
  %1191 = vmatpush.msra.mxu0 %v383
  %1192 = vmatpush.msra.mxu0 %v382
  %1193 = vmatpush.msra.mxu0 %v381
  %1194 = vmatpush.msra.mxu0 %v380
  %1195 = vmatmul.f32.gmra.mxu0 %v1176
  %v1196 = vpop.f32.mrf.mxu0
  %v1197 = vadd.f32 %v1178, %v1196
  %1198 = vdwg.mxu0
  %v1199 = vtanh.pop %v1197
  %s1200 = scalar_lea.vmem [#allocation2], 280
  %v1201 = vld [vmem:[%s1200] sm:$0xff]
  %1202 = vmatpush.msra.mxu0 %v395
  %1203 = vmatpush.msra.mxu0 %v394
  %1204 = vmatpush.msra.mxu0 %v393
  %1205 = vmatpush.msra.mxu0 %v392
  %1206 = vmatpush.msra.mxu0 %v391
  %1207 = vmatpush.msra.mxu0 %v390
  %1208 = vmatpush.msra.mxu0 %v389
  %1209 = vmatpush.msra.mxu0 %v388
  %1210 = vmatpush.msra.mxu0 %v387
  %1211 = vmatpush.msra.mxu0 %v386
  %1212 = vmatpush.msra.mxu0 %v385
  %1213 = vmatpush.msra.mxu0 %v384
  %1214 = vmatpush.msra.mxu0 %v383
  %1215 = vmatpush.msra.mxu0 %v382
  %1216 = vmatpush.msra.mxu0 %v381
  %1217 = vmatpush.msra.mxu0 %v380
  %1218 = vmatmul.f32.gmra.mxu0 %v1199
  %v1219 = vpop.f32.mrf.mxu0
  %v1220 = vadd.f32 %v1201, %v1219
  %1221 = vdwg.mxu0
  %v1222 = vtanh.pop %v1220
  %s1223 = scalar_lea.vmem [#allocation2], 288
  %v1224 = vld [vmem:[%s1223] sm:$0xff]
  %1225 = vmatpush.msra.mxu0 %v395
  %1226 = vmatpush.msra.mxu0 %v394
  %1227 = vmatpush.msra.mxu0 %v393
  %1228 = vmatpush.msra.mxu0 %v392
  %1229 = vmatpush.msra.mxu0 %v391
  %1230 = vmatpush.msra.mxu0 %v390
  %1231 = vmatpush.msra.mxu0 %v389
  %1232 = vmatpush.msra.mxu0 %v388
  %1233 = vmatpush.msra.mxu0 %v387
  %1234 = vmatpush.msra.mxu0 %v386
  %1235 = vmatpush.msra.mxu0 %v385
  %1236 = vmatpush.msra.mxu0 %v384
  %1237 = vmatpush.msra.mxu0 %v383
  %1238 = vmatpush.msra.mxu0 %v382
  %1239 = vmatpush.msra.mxu0 %v381
  %1240 = vmatpush.msra.mxu0 %v380
  %1241 = vmatmul.f32.gmra.mxu0 %v1222
  %v1242 = vpop.f32.mrf.mxu0
  %v1243 = vadd.f32 %v1224, %v1242
  %1244 = vdwg.mxu0
  %v1245 = vtanh.pop %v1243
  %s1246 = scalar_lea.vmem [#allocation2], 296
  %v1247 = vld [vmem:[%s1246] sm:$0xff]
  %1248 = vmatpush.msra.mxu0 %v395
  %1249 = vmatpush.msra.mxu0 %v394
  %1250 = vmatpush.msra.mxu0 %v393
  %1251 = vmatpush.msra.mxu0 %v392
  %1252 = vmatpush.msra.mxu0 %v391
  %1253 = vmatpush.msra.mxu0 %v390
  %1254 = vmatpush.msra.mxu0 %v389
  %1255 = vmatpush.msra.mxu0 %v388
  %1256 = vmatpush.msra.mxu0 %v387
  %1257 = vmatpush.msra.mxu0 %v386
  %1258 = vmatpush.msra.mxu0 %v385
  %1259 = vmatpush.msra.mxu0 %v384
  %1260 = vmatpush.msra.mxu0 %v383
  %1261 = vmatpush.msra.mxu0 %v382
  %1262 = vmatpush.msra.mxu0 %v381
  %1263 = vmatpush.msra.mxu0 %v380
  %1264 = vmatmul.f32.gmra.mxu0 %v1245
  %v1265 = vpop.f32.mrf.mxu0
  %v1266 = vadd.f32 %v1247, %v1265
  %1267 = vdwg.mxu0
  %v1268 = vtanh.pop %v1266
  %s1269 = scalar_lea.vmem [#allocation2], 304
  %v1270 = vld [vmem:[%s1269] sm:$0xff]
  %1271 = vmatpush.msra.mxu0 %v395
  %1272 = vmatpush.msra.mxu0 %v394
  %1273 = vmatpush.msra.mxu0 %v393
  %1274 = vmatpush.msra.mxu0 %v392
  %1275 = vmatpush.msra.mxu0 %v391
  %1276 = vmatpush.msra.mxu0 %v390
  %1277 = vmatpush.msra.mxu0 %v389
  %1278 = vmatpush.msra.mxu0 %v388
  %1279 = vmatpush.msra.mxu0 %v387
  %1280 = vmatpush.msra.mxu0 %v386
  %1281 = vmatpush.msra.mxu0 %v385
  %1282 = vmatpush.msra.mxu0 %v384
  %1283 = vmatpush.msra.mxu0 %v383
  %1284 = vmatpush.msra.mxu0 %v382
  %1285 = vmatpush.msra.mxu0 %v381
  %1286 = vmatpush.msra.mxu0 %v380
  %1287 = vmatmul.f32.gmra.mxu0 %v1268
  %v1288 = vpop.f32.mrf.mxu0
  %v1289 = vadd.f32 %v1270, %v1288
  %1290 = vdwg.mxu0
  %v1291 = vtanh.pop %v1289
  %s1292 = scalar_lea.vmem [#allocation2], 312
  %v1293 = vld [vmem:[%s1292] sm:$0xff]
  %1294 = vmatpush.msra.mxu0 %v395
  %1295 = vmatpush.msra.mxu0 %v394
  %1296 = vmatpush.msra.mxu0 %v393
  %1297 = vmatpush.msra.mxu0 %v392
  %1298 = vmatpush.msra.mxu0 %v391
  %1299 = vmatpush.msra.mxu0 %v390
  %1300 = vmatpush.msra.mxu0 %v389
  %1301 = vmatpush.msra.mxu0 %v388
  %1302 = vmatpush.msra.mxu0 %v387
  %1303 = vmatpush.msra.mxu0 %v386
  %1304 = vmatpush.msra.mxu0 %v385
  %1305 = vmatpush.msra.mxu0 %v384
  %1306 = vmatpush.msra.mxu0 %v383
  %1307 = vmatpush.msra.mxu0 %v382
  %1308 = vmatpush.msra.mxu0 %v381
  %1309 = vmatpush.msra.mxu0 %v380
  %1310 = vmatmul.f32.gmra.mxu0 %v1291
  %v1311 = vpop.f32.mrf.mxu0
  %v1312 = vadd.f32 %v1293, %v1311
  %1313 = vdwg.mxu0
  %v1314 = vtanh.pop %v1312
  %v1315 = vperm.slane %v16, 0
  %v1316 = vmul.f32 %v1314, %v1315
  %1317 = vadd.xlane.f32.xlu0 %v1316
  %v1318 = vpop.xlane.xlu0 %1317
  %v1319 = vperm.slane %v17, 0
  %v1320 = vadd.f32 %v1318, %v1319
  %vm1321 = vcmask 7168
  %1322 = vst.msk [vmem:[%s3] sm:$0xff] %vm1321, %v1320
  // Predicated region
  $region14: #{tpu_custom_call.1} parent=0 // pred_check
    _
  $region15: #{tpu_custom_call.1} parent=0 // pred_check_branch
    %1324 = sbr.rel (0) target = $region17
  $region16: #{tpu_custom_call.1} parent=0 // pred_region
    _
  $region17: #{tpu_custom_call.1} parent=0 // pred_fallthru
    _
  // Predicated region
  $region18: #{tpu_custom_call.1} parent=0 // pred_check
    _
  $region19: #{tpu_custom_call.1} parent=0 // pred_check_branch
    %1326 = sbr.rel (0) target = $region21
  $region20: #{tpu_custom_call.1} parent=0 // pred_region
    _
  $region21: #{tpu_custom_call.1} parent=0 // pred_fallthru
    _

</llo_original>
